<compile_context>
chip_gen: v7x
topology: tpu7x:2x2x1
jax: 0.10.0
libtpu: 0.0.40
codegen_flags: <defaults>
</compile_context>

<pallas_src>
import math
import functools

import jax
import jax.numpy as jnp
from jax.experimental import pallas as pl
from jax.experimental.pallas import tpu as pltpu


def residual_attention_block_kernel(
    x_ref, mask_ref,
    ln1_g_ref, ln1_b_ref,
    w_in_ref, b_in_ref,
    w_out_ref, b_out_ref,
    ln2_g_ref, ln2_b_ref,
    w_fc_ref, b_fc_ref,
    w_proj_ref, b_proj_ref,
    out_ref,
    *, n_head: int, matmul_dtype,
):
    Bt, S, D = x_ref.shape
    hd = D // n_head
    scale = 1.0 / math.sqrt(hd)
    eps = 1e-5
    NEG = -1e30          # finite "minus infinity": no NaNs even if a row is fully masked
    md = matmul_dtype

    # (Bt, S, D) -> (Bt*S, D): all dense projections run as one big-M MXU matmul.
    x = x_ref[...].astype(jnp.float32).reshape(Bt * S, D)

    def layer_norm(v, g, b):
        mu = jnp.mean(v, axis=-1, keepdims=True)
        var = jnp.mean((v - mu) ** 2, axis=-1, keepdims=True)
        return (v - mu) * jax.lax.rsqrt(var + eps) * g + b

    def mm(a, w, b):
        # matmul operands in `md` (bf16 reaches MXU peak on v6e/v7x), fp32 accumulate.
        return jnp.dot(a.astype(md), w.astype(md),
                       preferred_element_type=jnp.float32) + b

    # ---------------- attention branch (pre-LN) ----------------
    xn = layer_norm(x, ln1_g_ref[...], ln1_b_ref[...])
    qkv = mm(xn, w_in_ref[...], b_in_ref[...])                  # (Bt*S, 3D) fp32

    # additive key-padding mask, hoisted out of the head loop (no re-broadcast per head)
    neg = jnp.where(mask_ref[...] > 0, NEG, 0.0).astype(jnp.float32)   # (Bt, 1, S)

    def head_slice(off):
        # lane slice + leading-dim reshape only (no lane-splitting relayout)
        return qkv[:, off:off + hd].reshape(Bt, S, hd).astype(md)

    head_outs = []
    for h in range(n_head):
        q = head_slice(h * hd)
        k = head_slice(D + h * hd)
        v = head_slice(2 * D + h * hd)

        s = jnp.einsum('bqd,bkd->bqk', q, k,
                       preferred_element_type=jnp.float32) * scale + neg   # (Bt,S,S)
        # manual softmax: max-subtract / exp / row-sum / EUP reciprocal
        m = jnp.max(s, axis=-1, keepdims=True)
        e = jnp.exp(s - m)
        l = jnp.sum(e, axis=-1, keepdims=True)
        p = (e * pl.reciprocal(l, approx=True)).astype(md)
        ho = jnp.einsum('bqk,bkd->bqd', p, v,
                        preferred_element_type=jnp.float32)                # (Bt,S,hd)
        head_outs.append(ho.reshape(Bt * S, hd))

    # concat heads once -> ONE full-D output projection (no n_head small-K matmuls)
    ho = jnp.concatenate(head_outs, axis=-1)                    # (Bt*S, D)
    x1 = x + mm(ho, w_out_ref[...], b_out_ref[...])             # residual 1

    # ---------------- MLP branch (pre-LN, QuickGELU) ----------------
    x1n = layer_norm(x1, ln2_g_ref[...], ln2_b_ref[...])
    hfc = mm(x1n, w_fc_ref[...], b_fc_ref[...])                 # (Bt*S, 4D)
    hfc = hfc * jax.nn.sigmoid(1.702 * hfc)                     # QuickGELU (fp32)
    out = x1 + mm(hfc, w_proj_ref[...], b_proj_ref[...])        # residual 2

    out_ref[...] = out.reshape(Bt, S, D).astype(out_ref.dtype)


def residual_attention_block(x_sbd, padding_mask, params, n_head, *,
                             block_b=None, matmul_dtype=None):
    """x_sbd: (S, B, D); padding_mask: (B, S) bool (True == padded key)."""
    S, B, D = x_sbd.shape
    assert D % n_head == 0, "d_model must be divisible by n_head"

    if matmul_dtype is None:
        matmul_dtype = x_sbd.dtype
    matmul_dtype = jnp.dtype(matmul_dtype)

    # Fuse several batch elements per grid step (amortizes ~0.35us/step overhead and
    # enlarges the matmul M dimension); shrink to a divisor of B.
    if block_b is None:
        block_b = max(1, min(B, 512 // max(S, 1)))
    block_b = max(1, min(block_b, B))
    while B % block_b:
        block_b -= 1

    x_bsd = jnp.transpose(x_sbd, (1, 0, 2))
    mask_i32 = padding_mask.astype(jnp.int32).reshape(B, 1, S)

    f32 = jnp.float32
    # Weight matrices in the matmul dtype (bf16 halves VMEM + hits MXU peak on
    # v6e/v7x); LayerNorm affine params and biases stay fp32.
    w_in = params["w_in"].astype(matmul_dtype)
    w_out = params["w_out"].astype(matmul_dtype)
    w_fc = params["w_fc"].astype(matmul_dtype)
    w_proj = params["w_proj"].astype(matmul_dtype)
    ln1_g = params["ln1_g"].astype(f32); ln1_b = params["ln1_b"].astype(f32)
    ln2_g = params["ln2_g"].astype(f32); ln2_b = params["ln2_b"].astype(f32)
    b_in = params["b_in"].astype(f32);   b_out = params["b_out"].astype(f32)
    b_fc = params["b_fc"].astype(f32);   b_proj = params["b_proj"].astype(f32)

    def full(shape):
        return pl.BlockSpec(shape, lambda b: (0,) * len(shape))

    kernel = functools.partial(residual_attention_block_kernel,
                               n_head=n_head, matmul_dtype=matmul_dtype)

    # Rough VMEM budget (double-buffered weights + activations), clamped to
    # [32 MiB, 64 MiB] so the limit is also safe under v7x's 64 MiB physical VMEM.
    def nbytes(a):
        return int(a.size) * a.dtype.itemsize
    weight_bytes = 2 * sum(nbytes(a) for a in (w_in, w_out, w_fc, w_proj))
    small_bytes = 2 * sum(nbytes(a) for a in (ln1_g, ln1_b, ln2_g, ln2_b,
                                              b_in, b_out, b_fc, b_proj))
    act_bytes = block_b * S * (16 * D + 4 * n_head * S) * 4
    io_bytes = 4 * block_b * S * D * x_bsd.dtype.itemsize
    est = 2 * (weight_bytes + small_bytes + act_bytes + io_bytes)
    vmem_limit = int(min(64 * 1024 * 1024, max(32 * 1024 * 1024, est)))

    # TODO(synk): for long sequences / v7x dual-core, add a second grid axis tiling
    # the query dimension with flash-style online-softmax accumulation.
    out_bsd = pl.pallas_call(
        kernel,
        out_shape=jax.ShapeDtypeStruct((B, S, D), x_bsd.dtype),
        grid=(B // block_b,),
        in_specs=[
            pl.BlockSpec((block_b, S, D), lambda b: (b, 0, 0)),   # x
            pl.BlockSpec((block_b, 1, S), lambda b: (b, 0, 0)),   # key padding mask
            full((1, D)), full((1, D)),                            # ln_1 gamma/beta
            full((D, 3 * D)), full((1, 3 * D)),                    # in_proj (transposed) / bias
            full((D, D)), full((1, D)),                            # out_proj (transposed) / bias
            full((1, D)), full((1, D)),                            # ln_2 gamma/beta
            full((D, 4 * D)), full((1, 4 * D)),                    # mlp.c_fc (transposed) / bias
            full((4 * D, D)), full((1, D)),                        # mlp.c_proj (transposed) / bias
        ],
        out_specs=pl.BlockSpec((block_b, S, D), lambda b: (b, 0, 0)),
        compiler_params=pltpu.CompilerParams(
            dimension_semantics=("parallel",),
            vmem_limit_bytes=vmem_limit,
        ),
    )(
        x_bsd, mask_i32,
        ln1_g, ln1_b, w_in, b_in, w_out, b_out,
        ln2_g, ln2_b, w_fc, b_fc, w_proj, b_proj,
    )
    return jnp.transpose(out_bsd, (1, 0, 2)), padding_mask


def reference(x_sbd, padding_mask, p, n_head):
    """Pure-JAX reference mirroring the PyTorch forward pass."""
    S, B, D = x_sbd.shape
    x = jnp.transpose(x_sbd, (1, 0, 2)).astype(jnp.float32)
    hd = D // n_head

    def ln(v, g, b):
        mu = v.mean(-1, keepdims=True)
        var = ((v - mu) ** 2).mean(-1, keepdims=True)
        return (v - mu) / jnp.sqrt(var + 1e-5) * g + b

    xn = ln(x, p["ln1_g"], p["ln1_b"])
    qkv = xn @ p["w_in"] + p["b_in"]
    q, k, v = jnp.split(qkv, 3, axis=-1)
    q = q.reshape(B, S, n_head, hd).transpose(0, 2, 1, 3) / math.sqrt(hd)
    k = k.reshape(B, S, n_head, hd).transpose(0, 2, 1, 3)
    v = v.reshape(B, S, n_head, hd).transpose(0, 2, 1, 3)
    s = jnp.einsum("bhqd,bhkd->bhqk", q, k)
    s = jnp.where(padding_mask[:, None, None, :], -jnp.inf, s)
    pa = jax.nn.softmax(s, axis=-1)
    ho = jnp.einsum("bhqk,bhkd->bhqd", pa, v).transpose(0, 2, 1, 3).reshape(B, S, D)
    x1 = x + ho @ p["w_out"] + p["b_out"]
    x1n = ln(x1, p["ln2_g"], p["ln2_b"])
    h = x1n @ p["w_fc"] + p["b_fc"]
    h = h * jax.nn.sigmoid(1.702 * h)
    out = x1 + h @ p["w_proj"] + p["b_proj"]
    return jnp.transpose(out, (1, 0, 2))


if __name__ == "__main__":
    S, B, D, H = 8, 2, 32, 4   # seq, batch, d_model, n_head

    key = jax.random.PRNGKey(0)
    ks = jax.random.split(key, 16)
    f32 = jnp.float32

    params = {
        "ln1_g": 1.0 + 0.1 * jax.random.normal(ks[0], (1, D), f32),
        "ln1_b": 0.05 * jax.random.normal(ks[1], (1, D), f32),
        "w_in":  0.05 * jax.random.normal(ks[2], (D, 3 * D), f32),   # in_proj_weight.T
        "b_in":  0.02 * jax.random.normal(ks[3], (1, 3 * D), f32),
        "w_out": 0.05 * jax.random.normal(ks[4], (D, D), f32),       # out_proj.weight.T
        "b_out": 0.02 * jax.random.normal(ks[5], (1, D), f32),
        "ln2_g": 1.0 + 0.1 * jax.random.normal(ks[6], (1, D), f32),
        "ln2_b": 0.05 * jax.random.normal(ks[7], (1, D), f32),
        "w_fc":  0.05 * jax.random.normal(ks[8], (D, 4 * D), f32),   # c_fc.weight.T
        "b_fc":  0.02 * jax.random.normal(ks[9], (1, 4 * D), f32),
        "w_proj": 0.05 * jax.random.normal(ks[10], (4 * D, D), f32), # c_proj.weight.T
        "b_proj": 0.02 * jax.random.normal(ks[11], (1, D), f32),
    }

    x = jax.random.normal(ks[12], (S, B, D), f32)
    # key_padding_mask: True == padded key; pad last positions (never all-padded)
    padding_mask = jnp.zeros((B, S), jnp.bool_)
    padding_mask = padding_mask.at[0, S - 2:].set(True)
    padding_mask = padding_mask.at[1, S - 1:].set(True)

    # TODO(synk): attn_mask is None in this instantiation; an additive attn_mask
    # would just be another (S, S) bias added to the scores inside the kernel.

    ref = reference(x, padding_mask, params, H)

    # fp32 matmuls, one batch element per grid step (exercises the grid loop)
    out1, mask_out = residual_attention_block(
        x, padding_mask, params, H, block_b=1, matmul_dtype=jnp.float32)
    out1 = jax.block_until_ready(out1)
    assert out1.shape == (S, B, D) and out1.dtype == jnp.float32
    assert jnp.allclose(out1, ref, rtol=2e-3, atol=2e-3), (
        float(jnp.max(jnp.abs(out1 - ref))))

    # fp32 matmuls, whole batch fused into one grid step
    out2, _ = residual_attention_block(x, padding_mask, params, H,
                                       matmul_dtype=jnp.float32)
    out2 = jax.block_until_ready(out2)
    assert jnp.allclose(out2, ref, rtol=2e-3, atol=2e-3), (
        float(jnp.max(jnp.abs(out2 - ref))))

    # bf16 matmul operands / weights (fp32 accumulate + fp32 LN/softmax/GELU)
    out3, _ = residual_attention_block(x, padding_mask, params, H,
                                       matmul_dtype=jnp.bfloat16)
    out3 = jax.block_until_ready(out3)
    assert jnp.allclose(out3, ref, rtol=3e-2, atol=3e-2), (
        float(jnp.max(jnp.abs(out3 - ref))))

    assert bool(jnp.all(mask_out == padding_mask))
    print("KERNEL_OK")
</pallas_src>

<mosaic_0001>
module attributes {stable_mosaic.version = 11 : i64} {
  func.func @residual_attention_block_kernel(%arg0: i32, %arg1: memref<1x8x32xf32, #tpu.memory_space<vmem>>, %arg2: memref<1x1x8xi32, #tpu.memory_space<vmem>>, %arg3: memref<1x32xf32, #tpu.memory_space<vmem>>, %arg4: memref<1x32xf32, #tpu.memory_space<vmem>>, %arg5: memref<32x96xf32, #tpu.memory_space<vmem>>, %arg6: memref<1x96xf32, #tpu.memory_space<vmem>>, %arg7: memref<32x32xf32, #tpu.memory_space<vmem>>, %arg8: memref<1x32xf32, #tpu.memory_space<vmem>>, %arg9: memref<1x32xf32, #tpu.memory_space<vmem>>, %arg10: memref<1x32xf32, #tpu.memory_space<vmem>>, %arg11: memref<32x128xf32, #tpu.memory_space<vmem>>, %arg12: memref<1x128xf32, #tpu.memory_space<vmem>>, %arg13: memref<128x32xf32, #tpu.memory_space<vmem>>, %arg14: memref<1x32xf32, #tpu.memory_space<vmem>>, %arg15: memref<1x8x32xf32, #tpu.memory_space<vmem>>) attributes {dimension_semantics = [#tpu.dimension_semantics<parallel>], iteration_bounds = array<i64: 2>, scalar_prefetch = 0 : i64, scratch_operands = 0 : i64, tpu.core_type = #tpu.core_type<tc>, window_params = [{transform_indices = @transform_0, window_bounds = array<i64: 1, 8, 32>}, {transform_indices = @transform_1, window_bounds = array<i64: 1, 1, 8>}, {pipeline_mode = #tpu.pipeline_mode<synchronous>, transform_indices = @transform_2, window_bounds = array<i64: 1, 32>}, {pipeline_mode = #tpu.pipeline_mode<synchronous>, transform_indices = @transform_3, window_bounds = array<i64: 1, 32>}, {pipeline_mode = #tpu.pipeline_mode<synchronous>, transform_indices = @transform_4, window_bounds = array<i64: 32, 96>}, {pipeline_mode = #tpu.pipeline_mode<synchronous>, transform_indices = @transform_5, window_bounds = array<i64: 1, 96>}, {pipeline_mode = #tpu.pipeline_mode<synchronous>, transform_indices = @transform_6, window_bounds = array<i64: 32, 32>}, {pipeline_mode = #tpu.pipeline_mode<synchronous>, transform_indices = @transform_7, window_bounds = array<i64: 1, 32>}, {pipeline_mode = #tpu.pipeline_mode<synchronous>, transform_indices = @transform_8, window_bounds = array<i64: 1, 32>}, {pipeline_mode = #tpu.pipeline_mode<synchronous>, transform_indices = @transform_9, window_bounds = array<i64: 1, 32>}, {pipeline_mode = #tpu.pipeline_mode<synchronous>, transform_indices = @transform_10, window_bounds = array<i64: 32, 128>}, {pipeline_mode = #tpu.pipeline_mode<synchronous>, transform_indices = @transform_11, window_bounds = array<i64: 1, 128>}, {pipeline_mode = #tpu.pipeline_mode<synchronous>, transform_indices = @transform_12, window_bounds = array<i64: 128, 32>}, {pipeline_mode = #tpu.pipeline_mode<synchronous>, transform_indices = @transform_13, window_bounds = array<i64: 1, 32>}, {transform_indices = @transform_14, window_bounds = array<i64: 1, 8, 32>}]} {
    %c0 = arith.constant 0 : index
    %c0_0 = arith.constant 0 : index
    %c0_1 = arith.constant 0 : index
    %0 = vector.load %arg1[%c0, %c0_0, %c0_1] : memref<1x8x32xf32, #tpu.memory_space<vmem>>, vector<1x8x32xf32>
    %1 = vector.shape_cast %0 : vector<1x8x32xf32> to vector<8x32xf32>
    %c0_2 = arith.constant 0 : index
    %c0_3 = arith.constant 0 : index
    %2 = vector.load %arg3[%c0_2, %c0_3] : memref<1x32xf32, #tpu.memory_space<vmem>>, vector<1x32xf32>
    %c0_4 = arith.constant 0 : index
    %c0_5 = arith.constant 0 : index
    %3 = vector.load %arg4[%c0_4, %c0_5] : memref<1x32xf32, #tpu.memory_space<vmem>>, vector<1x32xf32>
    %cst = arith.constant dense<0.000000e+00> : vector<8xf32>
    %4 = vector.multi_reduction <add>, %1, %cst [1] : vector<8x32xf32> to vector<8xf32>
    %5 = vector.shape_cast %4 : vector<8xf32> to vector<8x1xf32>
    %cst_6 = arith.constant 3.200000e+01 : f32
    %6 = vector.broadcast %cst_6 : f32 to vector<8x1xf32>
    %7 = arith.divf %5, %6 : vector<8x1xf32>
    %8 = vector.broadcast %7 : vector<8x1xf32> to vector<8x32xf32>
    %9 = arith.subf %1, %8 : vector<8x32xf32>
    %10 = arith.mulf %9, %9 : vector<8x32xf32>
    %cst_7 = arith.constant dense<0.000000e+00> : vector<8xf32>
    %11 = vector.multi_reduction <add>, %10, %cst_7 [1] : vector<8x32xf32> to vector<8xf32>
    %12 = vector.shape_cast %11 : vector<8xf32> to vector<8x1xf32>
    %cst_8 = arith.constant 3.200000e+01 : f32
    %13 = vector.broadcast %cst_8 : f32 to vector<8x1xf32>
    %14 = arith.divf %12, %13 : vector<8x1xf32>
    %15 = vector.broadcast %7 : vector<8x1xf32> to vector<8x32xf32>
    %16 = arith.subf %1, %15 : vector<8x32xf32>
    %cst_9 = arith.constant 9.99999974E-6 : f32
    %17 = vector.broadcast %cst_9 : f32 to vector<8x1xf32>
    %18 = arith.addf %14, %17 : vector<8x1xf32>
    %19 = math.rsqrt %18 : vector<8x1xf32>
    %20 = vector.broadcast %19 : vector<8x1xf32> to vector<8x32xf32>
    %21 = arith.mulf %16, %20 : vector<8x32xf32>
    %22 = vector.broadcast %2 : vector<1x32xf32> to vector<8x32xf32>
    %23 = arith.mulf %21, %22 : vector<8x32xf32>
    %24 = vector.broadcast %3 : vector<1x32xf32> to vector<8x32xf32>
    %25 = arith.addf %23, %24 : vector<8x32xf32>
    %c0_10 = arith.constant 0 : index
    %c0_11 = arith.constant 0 : index
    %26 = vector.load %arg5[%c0_10, %c0_11] : memref<32x96xf32, #tpu.memory_space<vmem>>, vector<32x96xf32>
    %c0_12 = arith.constant 0 : index
    %c0_13 = arith.constant 0 : index
    %27 = vector.load %arg6[%c0_12, %c0_13] : memref<1x96xf32, #tpu.memory_space<vmem>>, vector<1x96xf32>
    %cst_14 = arith.constant dense<0.000000e+00> : vector<8x96xf32>
    %28 = tpu.matmul %25, %26, %cst_14 {dimension_numbers = #tpu.dot_dimension_numbers<[1], [0], [0], [1], [0, 0, 1, 1], [], []>} : vector<8x32xf32>, vector<32x96xf32>, vector<8x96xf32> -> vector<8x96xf32>
    %29 = vector.broadcast %27 : vector<1x96xf32> to vector<8x96xf32>
    %30 = arith.addf %28, %29 : vector<8x96xf32>
    %c0_15 = arith.constant 0 : index
    %c0_16 = arith.constant 0 : index
    %c0_17 = arith.constant 0 : index
    %31 = vector.load %arg2[%c0_15, %c0_16, %c0_17] : memref<1x1x8xi32, #tpu.memory_space<vmem>>, vector<1x1x8xi32>
    %c0_i32 = arith.constant 0 : i32
    %32 = vector.broadcast %c0_i32 : i32 to vector<1x1x8xi32>
    %33 = arith.cmpi sgt, %31, %32 : vector<1x1x8xi32>
    %cst_18 = arith.constant -1.000000e+30 : f32
    %cst_19 = arith.constant 0.000000e+00 : f32
    %34 = vector.broadcast %cst_18 : f32 to vector<1x1x8xf32>
    %35 = vector.broadcast %cst_19 : f32 to vector<1x1x8xf32>
    %36 = arith.select %33, %34, %35 : vector<1x1x8xi1>, vector<1x1x8xf32>
    %37 = vector.extract_strided_slice %30 {offsets = [0, 0], sizes = [8, 8], strides = [1, 1]} : vector<8x96xf32> to vector<8x8xf32>
    %38 = vector.shape_cast %37 : vector<8x8xf32> to vector<1x8x8xf32>
    %39 = vector.extract_strided_slice %30 {offsets = [0, 32], sizes = [8, 8], strides = [1, 1]} : vector<8x96xf32> to vector<8x8xf32>
    %40 = vector.shape_cast %39 : vector<8x8xf32> to vector<1x8x8xf32>
    %41 = vector.extract_strided_slice %30 {offsets = [0, 64], sizes = [8, 8], strides = [1, 1]} : vector<8x96xf32> to vector<8x8xf32>
    %42 = vector.shape_cast %41 : vector<8x8xf32> to vector<1x8x8xf32>
    "tpu.trace_start"() <{level = 10 : i32, message = "bqd,bkd->bqk"}> : () -> ()
    %cst_20 = arith.constant dense<0.000000e+00> : vector<1x8x8xf32>
    %43 = tpu.matmul %38, %40, %cst_20 {dimension_numbers = #tpu.dot_dimension_numbers<[2], [2], [1], [1], [0, 0, 0, 1, 1, 1], [0], [0]>} : vector<1x8x8xf32>, vector<1x8x8xf32>, vector<1x8x8xf32> -> vector<1x8x8xf32>
    "tpu.trace_stop"() : () -> ()
    %cst_21 = arith.constant 0.353553385 : f32
    %44 = vector.broadcast %cst_21 : f32 to vector<1x8x8xf32>
    %45 = arith.mulf %43, %44 : vector<1x8x8xf32>
    %46 = vector.broadcast %36 : vector<1x1x8xf32> to vector<1x8x8xf32>
    %47 = arith.addf %45, %46 : vector<1x8x8xf32>
    %cst_22 = arith.constant dense<0xFF800000> : vector<1x8xf32>
    %48 = vector.multi_reduction <maximumf>, %47, %cst_22 [2] : vector<1x8x8xf32> to vector<1x8xf32>
    %49 = vector.shape_cast %48 : vector<1x8xf32> to vector<1x8x1xf32>
    %50 = vector.broadcast %49 : vector<1x8x1xf32> to vector<1x8x8xf32>
    %51 = arith.subf %47, %50 : vector<1x8x8xf32>
    %52 = math.exp %51 : vector<1x8x8xf32>
    %cst_23 = arith.constant dense<0.000000e+00> : vector<1x8xf32>
    %53 = vector.multi_reduction <add>, %52, %cst_23 [2] : vector<1x8x8xf32> to vector<1x8xf32>
    %54 = vector.shape_cast %53 : vector<1x8xf32> to vector<1x8x1xf32>
    %55 = tpu.reciprocal %54 {approx = true} : vector<1x8x1xf32> -> vector<1x8x1xf32>
    %56 = vector.broadcast %55 : vector<1x8x1xf32> to vector<1x8x8xf32>
    %57 = arith.mulf %52, %56 : vector<1x8x8xf32>
    "tpu.trace_start"() <{level = 10 : i32, message = "bqk,bkd->bqd"}> : () -> ()
    %cst_24 = arith.constant dense<0.000000e+00> : vector<1x8x8xf32>
    %58 = tpu.matmul %57, %42, %cst_24 {dimension_numbers = #tpu.dot_dimension_numbers<[2], [1], [1], [2], [0, 0, 0, 1, 1, 2], [0], [0]>} : vector<1x8x8xf32>, vector<1x8x8xf32>, vector<1x8x8xf32> -> vector<1x8x8xf32>
    "tpu.trace_stop"() : () -> ()
    %59 = vector.shape_cast %58 : vector<1x8x8xf32> to vector<8x8xf32>
    %60 = vector.extract_strided_slice %30 {offsets = [0, 8], sizes = [8, 8], strides = [1, 1]} : vector<8x96xf32> to vector<8x8xf32>
    %61 = vector.shape_cast %60 : vector<8x8xf32> to vector<1x8x8xf32>
    %62 = vector.extract_strided_slice %30 {offsets = [0, 40], sizes = [8, 8], strides = [1, 1]} : vector<8x96xf32> to vector<8x8xf32>
    %63 = vector.shape_cast %62 : vector<8x8xf32> to vector<1x8x8xf32>
    %64 = vector.extract_strided_slice %30 {offsets = [0, 72], sizes = [8, 8], strides = [1, 1]} : vector<8x96xf32> to vector<8x8xf32>
    %65 = vector.shape_cast %64 : vector<8x8xf32> to vector<1x8x8xf32>
    "tpu.trace_start"() <{level = 10 : i32, message = "bqd,bkd->bqk"}> : () -> ()
    %cst_25 = arith.constant dense<0.000000e+00> : vector<1x8x8xf32>
    %66 = tpu.matmul %61, %63, %cst_25 {dimension_numbers = #tpu.dot_dimension_numbers<[2], [2], [1], [1], [0, 0, 0, 1, 1, 1], [0], [0]>} : vector<1x8x8xf32>, vector<1x8x8xf32>, vector<1x8x8xf32> -> vector<1x8x8xf32>
    "tpu.trace_stop"() : () -> ()
    %cst_26 = arith.constant 0.353553385 : f32
    %67 = vector.broadcast %cst_26 : f32 to vector<1x8x8xf32>
    %68 = arith.mulf %66, %67 : vector<1x8x8xf32>
    %69 = vector.broadcast %36 : vector<1x1x8xf32> to vector<1x8x8xf32>
    %70 = arith.addf %68, %69 : vector<1x8x8xf32>
    %cst_27 = arith.constant dense<0xFF800000> : vector<1x8xf32>
    %71 = vector.multi_reduction <maximumf>, %70, %cst_27 [2] : vector<1x8x8xf32> to vector<1x8xf32>
    %72 = vector.shape_cast %71 : vector<1x8xf32> to vector<1x8x1xf32>
    %73 = vector.broadcast %72 : vector<1x8x1xf32> to vector<1x8x8xf32>
    %74 = arith.subf %70, %73 : vector<1x8x8xf32>
    %75 = math.exp %74 : vector<1x8x8xf32>
    %cst_28 = arith.constant dense<0.000000e+00> : vector<1x8xf32>
    %76 = vector.multi_reduction <add>, %75, %cst_28 [2] : vector<1x8x8xf32> to vector<1x8xf32>
    %77 = vector.shape_cast %76 : vector<1x8xf32> to vector<1x8x1xf32>
    %78 = tpu.reciprocal %77 {approx = true} : vector<1x8x1xf32> -> vector<1x8x1xf32>
    %79 = vector.broadcast %78 : vector<1x8x1xf32> to vector<1x8x8xf32>
    %80 = arith.mulf %75, %79 : vector<1x8x8xf32>
    "tpu.trace_start"() <{level = 10 : i32, message = "bqk,bkd->bqd"}> : () -> ()
    %cst_29 = arith.constant dense<0.000000e+00> : vector<1x8x8xf32>
    %81 = tpu.matmul %80, %65, %cst_29 {dimension_numbers = #tpu.dot_dimension_numbers<[2], [1], [1], [2], [0, 0, 0, 1, 1, 2], [0], [0]>} : vector<1x8x8xf32>, vector<1x8x8xf32>, vector<1x8x8xf32> -> vector<1x8x8xf32>
    "tpu.trace_stop"() : () -> ()
    %82 = vector.shape_cast %81 : vector<1x8x8xf32> to vector<8x8xf32>
    %83 = vector.extract_strided_slice %30 {offsets = [0, 16], sizes = [8, 8], strides = [1, 1]} : vector<8x96xf32> to vector<8x8xf32>
    %84 = vector.shape_cast %83 : vector<8x8xf32> to vector<1x8x8xf32>
    %85 = vector.extract_strided_slice %30 {offsets = [0, 48], sizes = [8, 8], strides = [1, 1]} : vector<8x96xf32> to vector<8x8xf32>
    %86 = vector.shape_cast %85 : vector<8x8xf32> to vector<1x8x8xf32>
    %87 = vector.extract_strided_slice %30 {offsets = [0, 80], sizes = [8, 8], strides = [1, 1]} : vector<8x96xf32> to vector<8x8xf32>
    %88 = vector.shape_cast %87 : vector<8x8xf32> to vector<1x8x8xf32>
    "tpu.trace_start"() <{level = 10 : i32, message = "bqd,bkd->bqk"}> : () -> ()
    %cst_30 = arith.constant dense<0.000000e+00> : vector<1x8x8xf32>
    %89 = tpu.matmul %84, %86, %cst_30 {dimension_numbers = #tpu.dot_dimension_numbers<[2], [2], [1], [1], [0, 0, 0, 1, 1, 1], [0], [0]>} : vector<1x8x8xf32>, vector<1x8x8xf32>, vector<1x8x8xf32> -> vector<1x8x8xf32>
    "tpu.trace_stop"() : () -> ()
    %cst_31 = arith.constant 0.353553385 : f32
    %90 = vector.broadcast %cst_31 : f32 to vector<1x8x8xf32>
    %91 = arith.mulf %89, %90 : vector<1x8x8xf32>
    %92 = vector.broadcast %36 : vector<1x1x8xf32> to vector<1x8x8xf32>
    %93 = arith.addf %91, %92 : vector<1x8x8xf32>
    %cst_32 = arith.constant dense<0xFF800000> : vector<1x8xf32>
    %94 = vector.multi_reduction <maximumf>, %93, %cst_32 [2] : vector<1x8x8xf32> to vector<1x8xf32>
    %95 = vector.shape_cast %94 : vector<1x8xf32> to vector<1x8x1xf32>
    %96 = vector.broadcast %95 : vector<1x8x1xf32> to vector<1x8x8xf32>
    %97 = arith.subf %93, %96 : vector<1x8x8xf32>
    %98 = math.exp %97 : vector<1x8x8xf32>
    %cst_33 = arith.constant dense<0.000000e+00> : vector<1x8xf32>
    %99 = vector.multi_reduction <add>, %98, %cst_33 [2] : vector<1x8x8xf32> to vector<1x8xf32>
    %100 = vector.shape_cast %99 : vector<1x8xf32> to vector<1x8x1xf32>
    %101 = tpu.reciprocal %100 {approx = true} : vector<1x8x1xf32> -> vector<1x8x1xf32>
    %102 = vector.broadcast %101 : vector<1x8x1xf32> to vector<1x8x8xf32>
    %103 = arith.mulf %98, %102 : vector<1x8x8xf32>
    "tpu.trace_start"() <{level = 10 : i32, message = "bqk,bkd->bqd"}> : () -> ()
    %cst_34 = arith.constant dense<0.000000e+00> : vector<1x8x8xf32>
    %104 = tpu.matmul %103, %88, %cst_34 {dimension_numbers = #tpu.dot_dimension_numbers<[2], [1], [1], [2], [0, 0, 0, 1, 1, 2], [0], [0]>} : vector<1x8x8xf32>, vector<1x8x8xf32>, vector<1x8x8xf32> -> vector<1x8x8xf32>
    "tpu.trace_stop"() : () -> ()
    %105 = vector.shape_cast %104 : vector<1x8x8xf32> to vector<8x8xf32>
    %106 = vector.extract_strided_slice %30 {offsets = [0, 24], sizes = [8, 8], strides = [1, 1]} : vector<8x96xf32> to vector<8x8xf32>
    %107 = vector.shape_cast %106 : vector<8x8xf32> to vector<1x8x8xf32>
    %108 = vector.extract_strided_slice %30 {offsets = [0, 56], sizes = [8, 8], strides = [1, 1]} : vector<8x96xf32> to vector<8x8xf32>
    %109 = vector.shape_cast %108 : vector<8x8xf32> to vector<1x8x8xf32>
    %110 = vector.extract_strided_slice %30 {offsets = [0, 88], sizes = [8, 8], strides = [1, 1]} : vector<8x96xf32> to vector<8x8xf32>
    %111 = vector.shape_cast %110 : vector<8x8xf32> to vector<1x8x8xf32>
    "tpu.trace_start"() <{level = 10 : i32, message = "bqd,bkd->bqk"}> : () -> ()
    %cst_35 = arith.constant dense<0.000000e+00> : vector<1x8x8xf32>
    %112 = tpu.matmul %107, %109, %cst_35 {dimension_numbers = #tpu.dot_dimension_numbers<[2], [2], [1], [1], [0, 0, 0, 1, 1, 1], [0], [0]>} : vector<1x8x8xf32>, vector<1x8x8xf32>, vector<1x8x8xf32> -> vector<1x8x8xf32>
    "tpu.trace_stop"() : () -> ()
    %cst_36 = arith.constant 0.353553385 : f32
    %113 = vector.broadcast %cst_36 : f32 to vector<1x8x8xf32>
    %114 = arith.mulf %112, %113 : vector<1x8x8xf32>
    %115 = vector.broadcast %36 : vector<1x1x8xf32> to vector<1x8x8xf32>
    %116 = arith.addf %114, %115 : vector<1x8x8xf32>
    %cst_37 = arith.constant dense<0xFF800000> : vector<1x8xf32>
    %117 = vector.multi_reduction <maximumf>, %116, %cst_37 [2] : vector<1x8x8xf32> to vector<1x8xf32>
    %118 = vector.shape_cast %117 : vector<1x8xf32> to vector<1x8x1xf32>
    %119 = vector.broadcast %118 : vector<1x8x1xf32> to vector<1x8x8xf32>
    %120 = arith.subf %116, %119 : vector<1x8x8xf32>
    %121 = math.exp %120 : vector<1x8x8xf32>
    %cst_38 = arith.constant dense<0.000000e+00> : vector<1x8xf32>
    %122 = vector.multi_reduction <add>, %121, %cst_38 [2] : vector<1x8x8xf32> to vector<1x8xf32>
    %123 = vector.shape_cast %122 : vector<1x8xf32> to vector<1x8x1xf32>
    %124 = tpu.reciprocal %123 {approx = true} : vector<1x8x1xf32> -> vector<1x8x1xf32>
    %125 = vector.broadcast %124 : vector<1x8x1xf32> to vector<1x8x8xf32>
    %126 = arith.mulf %121, %125 : vector<1x8x8xf32>
    "tpu.trace_start"() <{level = 10 : i32, message = "bqk,bkd->bqd"}> : () -> ()
    %cst_39 = arith.constant dense<0.000000e+00> : vector<1x8x8xf32>
    %127 = tpu.matmul %126, %111, %cst_39 {dimension_numbers = #tpu.dot_dimension_numbers<[2], [1], [1], [2], [0, 0, 0, 1, 1, 2], [0], [0]>} : vector<1x8x8xf32>, vector<1x8x8xf32>, vector<1x8x8xf32> -> vector<1x8x8xf32>
    "tpu.trace_stop"() : () -> ()
    %128 = vector.shape_cast %127 : vector<1x8x8xf32> to vector<8x8xf32>
    %129 = tpu.concatenate %59, %82, %105, %128 in 1 : vector<8x8xf32>, vector<8x8xf32>, vector<8x8xf32>, vector<8x8xf32> -> vector<8x32xf32>
    %c0_40 = arith.constant 0 : index
    %c0_41 = arith.constant 0 : index
    %130 = vector.load %arg7[%c0_40, %c0_41] : memref<32x32xf32, #tpu.memory_space<vmem>>, vector<32x32xf32>
    %c0_42 = arith.constant 0 : index
    %c0_43 = arith.constant 0 : index
    %131 = vector.load %arg8[%c0_42, %c0_43] : memref<1x32xf32, #tpu.memory_space<vmem>>, vector<1x32xf32>
    %cst_44 = arith.constant dense<0.000000e+00> : vector<8x32xf32>
    %132 = tpu.matmul %129, %130, %cst_44 {dimension_numbers = #tpu.dot_dimension_numbers<[1], [0], [0], [1], [0, 0, 1, 1], [], []>} : vector<8x32xf32>, vector<32x32xf32>, vector<8x32xf32> -> vector<8x32xf32>
    %133 = vector.broadcast %131 : vector<1x32xf32> to vector<8x32xf32>
    %134 = arith.addf %132, %133 : vector<8x32xf32>
    %135 = arith.addf %1, %134 : vector<8x32xf32>
    %c0_45 = arith.constant 0 : index
    %c0_46 = arith.constant 0 : index
    %136 = vector.load %arg9[%c0_45, %c0_46] : memref<1x32xf32, #tpu.memory_space<vmem>>, vector<1x32xf32>
    %c0_47 = arith.constant 0 : index
    %c0_48 = arith.constant 0 : index
    %137 = vector.load %arg10[%c0_47, %c0_48] : memref<1x32xf32, #tpu.memory_space<vmem>>, vector<1x32xf32>
    %cst_49 = arith.constant dense<0.000000e+00> : vector<8xf32>
    %138 = vector.multi_reduction <add>, %135, %cst_49 [1] : vector<8x32xf32> to vector<8xf32>
    %139 = vector.shape_cast %138 : vector<8xf32> to vector<8x1xf32>
    %cst_50 = arith.constant 3.200000e+01 : f32
    %140 = vector.broadcast %cst_50 : f32 to vector<8x1xf32>
    %141 = arith.divf %139, %140 : vector<8x1xf32>
    %142 = vector.broadcast %141 : vector<8x1xf32> to vector<8x32xf32>
    %143 = arith.subf %135, %142 : vector<8x32xf32>
    %144 = arith.mulf %143, %143 : vector<8x32xf32>
    %cst_51 = arith.constant dense<0.000000e+00> : vector<8xf32>
    %145 = vector.multi_reduction <add>, %144, %cst_51 [1] : vector<8x32xf32> to vector<8xf32>
    %146 = vector.shape_cast %145 : vector<8xf32> to vector<8x1xf32>
    %cst_52 = arith.constant 3.200000e+01 : f32
    %147 = vector.broadcast %cst_52 : f32 to vector<8x1xf32>
    %148 = arith.divf %146, %147 : vector<8x1xf32>
    %149 = vector.broadcast %141 : vector<8x1xf32> to vector<8x32xf32>
    %150 = arith.subf %135, %149 : vector<8x32xf32>
    %cst_53 = arith.constant 9.99999974E-6 : f32
    %151 = vector.broadcast %cst_53 : f32 to vector<8x1xf32>
    %152 = arith.addf %148, %151 : vector<8x1xf32>
    %153 = math.rsqrt %152 : vector<8x1xf32>
    %154 = vector.broadcast %153 : vector<8x1xf32> to vector<8x32xf32>
    %155 = arith.mulf %150, %154 : vector<8x32xf32>
    %156 = vector.broadcast %136 : vector<1x32xf32> to vector<8x32xf32>
    %157 = arith.mulf %155, %156 : vector<8x32xf32>
    %158 = vector.broadcast %137 : vector<1x32xf32> to vector<8x32xf32>
    %159 = arith.addf %157, %158 : vector<8x32xf32>
    %c0_54 = arith.constant 0 : index
    %c0_55 = arith.constant 0 : index
    %160 = vector.load %arg11[%c0_54, %c0_55] : memref<32x128xf32, #tpu.memory_space<vmem>>, vector<32x128xf32>
    %c0_56 = arith.constant 0 : index
    %c0_57 = arith.constant 0 : index
    %161 = vector.load %arg12[%c0_56, %c0_57] : memref<1x128xf32, #tpu.memory_space<vmem>>, vector<1x128xf32>
    %cst_58 = arith.constant dense<0.000000e+00> : vector<8x128xf32>
    %162 = tpu.matmul %159, %160, %cst_58 {dimension_numbers = #tpu.dot_dimension_numbers<[1], [0], [0], [1], [0, 0, 1, 1], [], []>} : vector<8x32xf32>, vector<32x128xf32>, vector<8x128xf32> -> vector<8x128xf32>
    %163 = vector.broadcast %161 : vector<1x128xf32> to vector<8x128xf32>
    %164 = arith.addf %162, %163 : vector<8x128xf32>
    %cst_59 = arith.constant 1.702000e+00 : f32
    %165 = vector.broadcast %cst_59 : f32 to vector<8x128xf32>
    %166 = arith.mulf %165, %164 : vector<8x128xf32>
    %167 = arith.negf %166 : vector<8x128xf32>
    %168 = math.exp %167 : vector<8x128xf32>
    %cst_60 = arith.constant 1.000000e+00 : f32
    %169 = vector.broadcast %cst_60 : f32 to vector<8x128xf32>
    %170 = arith.addf %169, %168 : vector<8x128xf32>
    %171 = arith.divf %169, %170 : vector<8x128xf32>
    %172 = arith.mulf %164, %171 : vector<8x128xf32>
    %c0_61 = arith.constant 0 : index
    %c0_62 = arith.constant 0 : index
    %173 = vector.load %arg13[%c0_61, %c0_62] : memref<128x32xf32, #tpu.memory_space<vmem>>, vector<128x32xf32>
    %c0_63 = arith.constant 0 : index
    %c0_64 = arith.constant 0 : index
    %174 = vector.load %arg14[%c0_63, %c0_64] : memref<1x32xf32, #tpu.memory_space<vmem>>, vector<1x32xf32>
    %cst_65 = arith.constant dense<0.000000e+00> : vector<8x32xf32>
    %175 = tpu.matmul %172, %173, %cst_65 {dimension_numbers = #tpu.dot_dimension_numbers<[1], [0], [0], [1], [0, 0, 1, 1], [], []>} : vector<8x128xf32>, vector<128x32xf32>, vector<8x32xf32> -> vector<8x32xf32>
    %176 = vector.broadcast %174 : vector<1x32xf32> to vector<8x32xf32>
    %177 = arith.addf %175, %176 : vector<8x32xf32>
    %178 = arith.addf %135, %177 : vector<8x32xf32>
    %179 = vector.shape_cast %178 : vector<8x32xf32> to vector<1x8x32xf32>
    %c0_66 = arith.constant 0 : index
    %c0_67 = arith.constant 0 : index
    %c0_68 = arith.constant 0 : index
    %180 = vector.load %arg15[%c0_66, %c0_67, %c0_68] : memref<1x8x32xf32, #tpu.memory_space<vmem>>, vector<1x8x32xf32>
    tpu.vector_store %arg15[%c0_66, %c0_67, %c0_68], %179 {strides = array<i32>} : memref<1x8x32xf32, #tpu.memory_space<vmem>>, vector<1x8x32xf32>,
    return
  }
  func.func @transform_0(%arg0: i32) -> (i32, i32, i32) {
    %c0_i32 = arith.constant 0 : i32
    %c0_i32_0 = arith.constant 0 : i32
    %c0_i32_1 = arith.constant 0 : i32
    return %arg0, %c0_i32, %c0_i32_0 : i32, i32, i32
  }
  func.func @transform_1(%arg0: i32) -> (i32, i32, i32) {
    %c0_i32 = arith.constant 0 : i32
    %c0_i32_0 = arith.constant 0 : i32
    %c0_i32_1 = arith.constant 0 : i32
    return %arg0, %c0_i32, %c0_i32_0 : i32, i32, i32
  }
  func.func @transform_2(%arg0: i32) -> (i32, i32) {
    %c0_i32 = arith.constant 0 : i32
    %c0_i32_0 = arith.constant 0 : i32
    %c0_i32_1 = arith.constant 0 : i32
    return %c0_i32, %c0_i32_0 : i32, i32
  }
  func.func @transform_3(%arg0: i32) -> (i32, i32) {
    %c0_i32 = arith.constant 0 : i32
    %c0_i32_0 = arith.constant 0 : i32
    %c0_i32_1 = arith.constant 0 : i32
    return %c0_i32, %c0_i32_0 : i32, i32
  }
  func.func @transform_4(%arg0: i32) -> (i32, i32) {
    %c0_i32 = arith.constant 0 : i32
    %c0_i32_0 = arith.constant 0 : i32
    %c0_i32_1 = arith.constant 0 : i32
    return %c0_i32, %c0_i32_0 : i32, i32
  }
  func.func @transform_5(%arg0: i32) -> (i32, i32) {
    %c0_i32 = arith.constant 0 : i32
    %c0_i32_0 = arith.constant 0 : i32
    %c0_i32_1 = arith.constant 0 : i32
    return %c0_i32, %c0_i32_0 : i32, i32
  }
  func.func @transform_6(%arg0: i32) -> (i32, i32) {
    %c0_i32 = arith.constant 0 : i32
    %c0_i32_0 = arith.constant 0 : i32
    %c0_i32_1 = arith.constant 0 : i32
    return %c0_i32, %c0_i32_0 : i32, i32
  }
  func.func @transform_7(%arg0: i32) -> (i32, i32) {
    %c0_i32 = arith.constant 0 : i32
    %c0_i32_0 = arith.constant 0 : i32
    %c0_i32_1 = arith.constant 0 : i32
    return %c0_i32, %c0_i32_0 : i32, i32
  }
  func.func @transform_8(%arg0: i32) -> (i32, i32) {
    %c0_i32 = arith.constant 0 : i32
    %c0_i32_0 = arith.constant 0 : i32
    %c0_i32_1 = arith.constant 0 : i32
    return %c0_i32, %c0_i32_0 : i32, i32
  }
  func.func @transform_9(%arg0: i32) -> (i32, i32) {
    %c0_i32 = arith.constant 0 : i32
    %c0_i32_0 = arith.constant 0 : i32
    %c0_i32_1 = arith.constant 0 : i32
    return %c0_i32, %c0_i32_0 : i32, i32
  }
  func.func @transform_10(%arg0: i32) -> (i32, i32) {
    %c0_i32 = arith.constant 0 : i32
    %c0_i32_0 = arith.constant 0 : i32
    %c0_i32_1 = arith.constant 0 : i32
    return %c0_i32, %c0_i32_0 : i32, i32
  }
  func.func @transform_11(%arg0: i32) -> (i32, i32) {
    %c0_i32 = arith.constant 0 : i32
    %c0_i32_0 = arith.constant 0 : i32
    %c0_i32_1 = arith.constant 0 : i32
    return %c0_i32, %c0_i32_0 : i32, i32
  }
  func.func @transform_12(%arg0: i32) -> (i32, i32) {
    %c0_i32 = arith.constant 0 : i32
    %c0_i32_0 = arith.constant 0 : i32
    %c0_i32_1 = arith.constant 0 : i32
    return %c0_i32, %c0_i32_0 : i32, i32
  }
  func.func @transform_13(%arg0: i32) -> (i32, i32) {
    %c0_i32 = arith.constant 0 : i32
    %c0_i32_0 = arith.constant 0 : i32
    %c0_i32_1 = arith.constant 0 : i32
    return %c0_i32, %c0_i32_0 : i32, i32
  }
  func.func @transform_14(%arg0: i32) -> (i32, i32, i32) {
    %c0_i32 = arith.constant 0 : i32
    %c0_i32_0 = arith.constant 0 : i32
    %c0_i32_1 = arith.constant 0 : i32
    return %arg0, %c0_i32, %c0_i32_0 : i32, i32, i32
  }
}

</mosaic_0001>

<llo_original>
// kernel: tpu_custom_call.1
$region0: #{tpu_custom_call.1}
  #allocation0 [shape = 'u32[]', space=smem, size = 0x4, offset = 0x4, fixed_abs, tag = 'smem constant byte address 0x4 - core index']
  #allocation1 [shape = 'u32[144,128]{1,0:T(1,128)}', space=vmem, size = 0x12000, scoped, tag = 'internal scratch']
  %s0 = inlined_call_operand.vmem [shape: f32[2,8,32], index: 0, kind: input, shape index: {}]
  %s1 = inlined_call_operand.vmem [shape: s32[2,1,8], index: 1, kind: input, shape index: {}]
  %s2 = inlined_call_operand.vmem [shape: f32[1,32], index: 2, kind: input, shape index: {}]
  %s3 = inlined_call_operand.vmem [shape: f32[1,32], index: 3, kind: input, shape index: {}]
  %s4 = inlined_call_operand.vmem [shape: f32[32,96], index: 4, kind: input, shape index: {}]
  %s5 = inlined_call_operand.vmem [shape: f32[1,96], index: 5, kind: input, shape index: {}]
  %s6 = inlined_call_operand.vmem [shape: f32[32,32], index: 6, kind: input, shape index: {}]
  %s7 = inlined_call_operand.vmem [shape: f32[1,32], index: 7, kind: input, shape index: {}]
  %s8 = inlined_call_operand.vmem [shape: f32[1,32], index: 8, kind: input, shape index: {}]
  %s9 = inlined_call_operand.vmem [shape: f32[1,32], index: 9, kind: input, shape index: {}]
  %s10 = inlined_call_operand.vmem [shape: f32[32,128], index: 10, kind: input, shape index: {}]
  %s11 = inlined_call_operand.vmem [shape: f32[1,128], index: 11, kind: input, shape index: {}]
  %s12 = inlined_call_operand.vmem [shape: f32[128,32], index: 12, kind: input, shape index: {}]
  %s13 = inlined_call_operand.vmem [shape: f32[1,32], index: 13, kind: input, shape index: {}]
  %s14 = inlined_call_operand.hbm [shape: f32[2,8,32], index: 14, kind: output, shape index: {}]
  %s15 = sld [smem:[#allocation0]]
  $region89: #{tpu_custom_call.1} parent=0
    _
  %s17 = ssub.s32 1, %s15
  %s18 = scalar_select 0, %s17, %s15
  $region1: #{tpu_custom_call.1} parent=0
    #allocation2 [shape = 'u8[8192]{0}', space=vmem, size = 0x2000, scoped, tag = 'output window, operand 0']
    #allocation3 [shape = 's32[2]{0}', space=sflag, size = 0x8, scoped, tag = 'scoped memory for tpu_custom_call.1']
    %19 = vsyncpa [#allocation3], 0
    %s20 = scalar_lea.sflag [#allocation3], 1
    %21 = vsyncpa %s20, 0
    loop: start=0, step=1, limit=4
    $region2: #{tpu_custom_call.1} parent=1 // loop_pre_header
      _
    $region3: #{tpu_custom_call.1} parent=1 // loop_header
      %s23 = sphi 0, %s27
      %p24 = scmp.ge.s32.totalorder %s23, 4
      %s33 = sphi 0, %s35
      %s36 = sphi 0, %s33
      %s37 = sphi 0, %s36
      %s53 = sphi 0, %s37
      %s59 = sphi 0, %s61
      %s62 = sphi 0, %s59
      %s63 = sphi 0, %s62
      %s79 = sphi 0, %s63
      %s83 = sphi 0, %s83
      %s85 = sphi 0, %s83
      %s86 = sphi 0, %s85
      %s100 = sphi 0, %s86
      %s104 = sphi 0, %s104
      %s106 = sphi 0, %s104
      %s107 = sphi 0, %s106
      %s121 = sphi 0, %s107
      %s125 = sphi 0, %s125
      %s127 = sphi 0, %s125
      %s128 = sphi 0, %s127
      %s142 = sphi 0, %s128
      %s146 = sphi 0, %s146
      %s148 = sphi 0, %s146
      %s149 = sphi 0, %s148
      %s163 = sphi 0, %s149
      %s167 = sphi 0, %s167
      %s169 = sphi 0, %s167
      %s170 = sphi 0, %s169
      %s184 = sphi 0, %s170
      %s188 = sphi 0, %s188
      %s190 = sphi 0, %s188
      %s191 = sphi 0, %s190
      %s205 = sphi 0, %s191
      %s209 = sphi 0, %s209
      %s211 = sphi 0, %s209
      %s212 = sphi 0, %s211
      %s226 = sphi 0, %s212
      %s230 = sphi 0, %s230
      %s232 = sphi 0, %s230
      %s233 = sphi 0, %s232
      %s247 = sphi 0, %s233
      %s251 = sphi 0, %s251
      %s253 = sphi 0, %s251
      %s254 = sphi 0, %s253
      %s268 = sphi 0, %s254
      %s272 = sphi 0, %s272
      %s274 = sphi 0, %s272
      %s275 = sphi 0, %s274
      %s289 = sphi 0, %s275
      %s293 = sphi 0, %s293
      %s295 = sphi 0, %s293
      %s296 = sphi 0, %s295
      %s310 = sphi 0, %s296
      %s314 = sphi 0, %s314
      %s316 = sphi 0, %s314
      %s317 = sphi 0, %s316
      %s331 = sphi 0, %s317
      %s337 = sphi 0, %s339
      %s340 = sphi 0, %s337
      %s341 = sphi 0, %s340
      %s357 = sphi 0, %s341
    $region4: #{tpu_custom_call.1} parent=1 // loop_header_branch
      %26 = sbr.rel (%p24) target = $region8
    $region5: #{tpu_custom_call.1} parent=1 // loop_body
      %s28 = ssub.s32 %s23, 1
      %s29 = ssub.s32 %s23, 2
      %s30 = sadd.s32 %s23, 1
      %s31 = ssub.s32 %s23, %s30
      %p32 = scmp.eq.s32.totalorder %s31, 0
      %s34 = sadd.s32 %s33, 1
      %s35 = scalar_select %p32, %s33, %s34
      %p38 = pneg %p32
      %p39 = scmp.eq.s32.totalorder %s23, 1
      %p40 = por %p38, %p39
      %p41 = scmp.ne.s32.totalorder %s33, %s36
      %p42 = scmp.eq.s32.totalorder %s23, 0
      %p43 = por %p41, %p42
      %p44 = scmp.ne.s32.totalorder %s33, %s36
      %p45 = scmp.eq.s32.totalorder %s28, 1
      %p46 = por %p44, %p45
      %p47 = scmp.ne.s32.totalorder %s36, %s37
      %p48 = scmp.eq.s32.totalorder %s28, 0
      %p49 = por %p47, %p48
      %p50 = scmp.ne.s32.totalorder %s36, %s37
      %p51 = scmp.eq.s32.totalorder %s29, 1
      %p52 = por %p50, %p51
      %p54 = scmp.ne.s32.totalorder %s37, %s53
      %p55 = scmp.eq.s32.totalorder %s29, 0
      %p56 = por %p54, %p55
      %s57 = ssub.s32 %s23, %s30
      %p58 = scmp.eq.s32.totalorder %s57, 0
      %s60 = sadd.s32 %s59, 1
      %s61 = scalar_select %p58, %s59, %s60
      %p64 = pneg %p58
      %p65 = scmp.eq.s32.totalorder %s23, 1
      %p66 = por %p64, %p65
      %p67 = scmp.ne.s32.totalorder %s59, %s62
      %p68 = scmp.eq.s32.totalorder %s23, 0
      %p69 = por %p67, %p68
      %p70 = scmp.ne.s32.totalorder %s59, %s62
      %p71 = scmp.eq.s32.totalorder %s28, 1
      %p72 = por %p70, %p71
      %p73 = scmp.ne.s32.totalorder %s62, %s63
      %p74 = scmp.eq.s32.totalorder %s28, 0
      %p75 = por %p73, %p74
      %p76 = scmp.ne.s32.totalorder %s62, %s63
      %p77 = scmp.eq.s32.totalorder %s29, 1
      %p78 = por %p76, %p77
      %p80 = scmp.ne.s32.totalorder %s63, %s79
      %p81 = scmp.eq.s32.totalorder %s29, 0
      %p82 = por %p80, %p81
      %s84 = sadd.s32 %s83, 1
      %p87 = scmp.eq.s32.totalorder %s23, 1
      %p88 = scmp.ne.s32.totalorder %s83, %s85
      %p89 = scmp.eq.s32.totalorder %s23, 0
      %p90 = por %p88, %p89
      %p91 = scmp.ne.s32.totalorder %s83, %s85
      %p92 = scmp.eq.s32.totalorder %s28, 1
      %p93 = por %p91, %p92
      %p94 = scmp.ne.s32.totalorder %s85, %s86
      %p95 = scmp.eq.s32.totalorder %s28, 0
      %p96 = por %p94, %p95
      %p97 = scmp.ne.s32.totalorder %s85, %s86
      %p98 = scmp.eq.s32.totalorder %s29, 1
      %p99 = por %p97, %p98
      %p101 = scmp.ne.s32.totalorder %s86, %s100
      %p102 = scmp.eq.s32.totalorder %s29, 0
      %p103 = por %p101, %p102
      %s105 = sadd.s32 %s104, 1
      %p108 = scmp.eq.s32.totalorder %s23, 1
      %p109 = scmp.ne.s32.totalorder %s104, %s106
      %p110 = scmp.eq.s32.totalorder %s23, 0
      %p111 = por %p109, %p110
      %p112 = scmp.ne.s32.totalorder %s104, %s106
      %p113 = scmp.eq.s32.totalorder %s28, 1
      %p114 = por %p112, %p113
      %p115 = scmp.ne.s32.totalorder %s106, %s107
      %p116 = scmp.eq.s32.totalorder %s28, 0
      %p117 = por %p115, %p116
      %p118 = scmp.ne.s32.totalorder %s106, %s107
      %p119 = scmp.eq.s32.totalorder %s29, 1
      %p120 = por %p118, %p119
      %p122 = scmp.ne.s32.totalorder %s107, %s121
      %p123 = scmp.eq.s32.totalorder %s29, 0
      %p124 = por %p122, %p123
      %s126 = sadd.s32 %s125, 1
      %p129 = scmp.eq.s32.totalorder %s23, 1
      %p130 = scmp.ne.s32.totalorder %s125, %s127
      %p131 = scmp.eq.s32.totalorder %s23, 0
      %p132 = por %p130, %p131
      %p133 = scmp.ne.s32.totalorder %s125, %s127
      %p134 = scmp.eq.s32.totalorder %s28, 1
      %p135 = por %p133, %p134
      %p136 = scmp.ne.s32.totalorder %s127, %s128
      %p137 = scmp.eq.s32.totalorder %s28, 0
      %p138 = por %p136, %p137
      %p139 = scmp.ne.s32.totalorder %s127, %s128
      %p140 = scmp.eq.s32.totalorder %s29, 1
      %p141 = por %p139, %p140
      %p143 = scmp.ne.s32.totalorder %s128, %s142
      %p144 = scmp.eq.s32.totalorder %s29, 0
      %p145 = por %p143, %p144
      %s147 = sadd.s32 %s146, 1
      %p150 = scmp.eq.s32.totalorder %s23, 1
      %p151 = scmp.ne.s32.totalorder %s146, %s148
      %p152 = scmp.eq.s32.totalorder %s23, 0
      %p153 = por %p151, %p152
      %p154 = scmp.ne.s32.totalorder %s146, %s148
      %p155 = scmp.eq.s32.totalorder %s28, 1
      %p156 = por %p154, %p155
      %p157 = scmp.ne.s32.totalorder %s148, %s149
      %p158 = scmp.eq.s32.totalorder %s28, 0
      %p159 = por %p157, %p158
      %p160 = scmp.ne.s32.totalorder %s148, %s149
      %p161 = scmp.eq.s32.totalorder %s29, 1
      %p162 = por %p160, %p161
      %p164 = scmp.ne.s32.totalorder %s149, %s163
      %p165 = scmp.eq.s32.totalorder %s29, 0
      %p166 = por %p164, %p165
      %s168 = sadd.s32 %s167, 1
      %p171 = scmp.eq.s32.totalorder %s23, 1
      %p172 = scmp.ne.s32.totalorder %s167, %s169
      %p173 = scmp.eq.s32.totalorder %s23, 0
      %p174 = por %p172, %p173
      %p175 = scmp.ne.s32.totalorder %s167, %s169
      %p176 = scmp.eq.s32.totalorder %s28, 1
      %p177 = por %p175, %p176
      %p178 = scmp.ne.s32.totalorder %s169, %s170
      %p179 = scmp.eq.s32.totalorder %s28, 0
      %p180 = por %p178, %p179
      %p181 = scmp.ne.s32.totalorder %s169, %s170
      %p182 = scmp.eq.s32.totalorder %s29, 1
      %p183 = por %p181, %p182
      %p185 = scmp.ne.s32.totalorder %s170, %s184
      %p186 = scmp.eq.s32.totalorder %s29, 0
      %p187 = por %p185, %p186
      %s189 = sadd.s32 %s188, 1
      %p192 = scmp.eq.s32.totalorder %s23, 1
      %p193 = scmp.ne.s32.totalorder %s188, %s190
      %p194 = scmp.eq.s32.totalorder %s23, 0
      %p195 = por %p193, %p194
      %p196 = scmp.ne.s32.totalorder %s188, %s190
      %p197 = scmp.eq.s32.totalorder %s28, 1
      %p198 = por %p196, %p197
      %p199 = scmp.ne.s32.totalorder %s190, %s191
      %p200 = scmp.eq.s32.totalorder %s28, 0
      %p201 = por %p199, %p200
      %p202 = scmp.ne.s32.totalorder %s190, %s191
      %p203 = scmp.eq.s32.totalorder %s29, 1
      %p204 = por %p202, %p203
      %p206 = scmp.ne.s32.totalorder %s191, %s205
      %p207 = scmp.eq.s32.totalorder %s29, 0
      %p208 = por %p206, %p207
      %s210 = sadd.s32 %s209, 1
      %p213 = scmp.eq.s32.totalorder %s23, 1
      %p214 = scmp.ne.s32.totalorder %s209, %s211
      %p215 = scmp.eq.s32.totalorder %s23, 0
      %p216 = por %p214, %p215
      %p217 = scmp.ne.s32.totalorder %s209, %s211
      %p218 = scmp.eq.s32.totalorder %s28, 1
      %p219 = por %p217, %p218
      %p220 = scmp.ne.s32.totalorder %s211, %s212
      %p221 = scmp.eq.s32.totalorder %s28, 0
      %p222 = por %p220, %p221
      %p223 = scmp.ne.s32.totalorder %s211, %s212
      %p224 = scmp.eq.s32.totalorder %s29, 1
      %p225 = por %p223, %p224
      %p227 = scmp.ne.s32.totalorder %s212, %s226
      %p228 = scmp.eq.s32.totalorder %s29, 0
      %p229 = por %p227, %p228
      %s231 = sadd.s32 %s230, 1
      %p234 = scmp.eq.s32.totalorder %s23, 1
      %p235 = scmp.ne.s32.totalorder %s230, %s232
      %p236 = scmp.eq.s32.totalorder %s23, 0
      %p237 = por %p235, %p236
      %p238 = scmp.ne.s32.totalorder %s230, %s232
      %p239 = scmp.eq.s32.totalorder %s28, 1
      %p240 = por %p238, %p239
      %p241 = scmp.ne.s32.totalorder %s232, %s233
      %p242 = scmp.eq.s32.totalorder %s28, 0
      %p243 = por %p241, %p242
      %p244 = scmp.ne.s32.totalorder %s232, %s233
      %p245 = scmp.eq.s32.totalorder %s29, 1
      %p246 = por %p244, %p245
      %p248 = scmp.ne.s32.totalorder %s233, %s247
      %p249 = scmp.eq.s32.totalorder %s29, 0
      %p250 = por %p248, %p249
      %s252 = sadd.s32 %s251, 1
      %p255 = scmp.eq.s32.totalorder %s23, 1
      %p256 = scmp.ne.s32.totalorder %s251, %s253
      %p257 = scmp.eq.s32.totalorder %s23, 0
      %p258 = por %p256, %p257
      %p259 = scmp.ne.s32.totalorder %s251, %s253
      %p260 = scmp.eq.s32.totalorder %s28, 1
      %p261 = por %p259, %p260
      %p262 = scmp.ne.s32.totalorder %s253, %s254
      %p263 = scmp.eq.s32.totalorder %s28, 0
      %p264 = por %p262, %p263
      %p265 = scmp.ne.s32.totalorder %s253, %s254
      %p266 = scmp.eq.s32.totalorder %s29, 1
      %p267 = por %p265, %p266
      %p269 = scmp.ne.s32.totalorder %s254, %s268
      %p270 = scmp.eq.s32.totalorder %s29, 0
      %p271 = por %p269, %p270
      %s273 = sadd.s32 %s272, 1
      %p276 = scmp.eq.s32.totalorder %s23, 1
      %p277 = scmp.ne.s32.totalorder %s272, %s274
      %p278 = scmp.eq.s32.totalorder %s23, 0
      %p279 = por %p277, %p278
      %p280 = scmp.ne.s32.totalorder %s272, %s274
      %p281 = scmp.eq.s32.totalorder %s28, 1
      %p282 = por %p280, %p281
      %p283 = scmp.ne.s32.totalorder %s274, %s275
      %p284 = scmp.eq.s32.totalorder %s28, 0
      %p285 = por %p283, %p284
      %p286 = scmp.ne.s32.totalorder %s274, %s275
      %p287 = scmp.eq.s32.totalorder %s29, 1
      %p288 = por %p286, %p287
      %p290 = scmp.ne.s32.totalorder %s275, %s289
      %p291 = scmp.eq.s32.totalorder %s29, 0
      %p292 = por %p290, %p291
      %s294 = sadd.s32 %s293, 1
      %p297 = scmp.eq.s32.totalorder %s23, 1
      %p298 = scmp.ne.s32.totalorder %s293, %s295
      %p299 = scmp.eq.s32.totalorder %s23, 0
      %p300 = por %p298, %p299
      %p301 = scmp.ne.s32.totalorder %s293, %s295
      %p302 = scmp.eq.s32.totalorder %s28, 1
      %p303 = por %p301, %p302
      %p304 = scmp.ne.s32.totalorder %s295, %s296
      %p305 = scmp.eq.s32.totalorder %s28, 0
      %p306 = por %p304, %p305
      %p307 = scmp.ne.s32.totalorder %s295, %s296
      %p308 = scmp.eq.s32.totalorder %s29, 1
      %p309 = por %p307, %p308
      %p311 = scmp.ne.s32.totalorder %s296, %s310
      %p312 = scmp.eq.s32.totalorder %s29, 0
      %p313 = por %p311, %p312
      %s315 = sadd.s32 %s314, 1
      %p318 = scmp.eq.s32.totalorder %s23, 1
      %p319 = scmp.ne.s32.totalorder %s314, %s316
      %p320 = scmp.eq.s32.totalorder %s23, 0
      %p321 = por %p319, %p320
      %p322 = scmp.ne.s32.totalorder %s314, %s316
      %p323 = scmp.eq.s32.totalorder %s28, 1
      %p324 = por %p322, %p323
      %p325 = scmp.ne.s32.totalorder %s316, %s317
      %p326 = scmp.eq.s32.totalorder %s28, 0
      %p327 = por %p325, %p326
      %p328 = scmp.ne.s32.totalorder %s316, %s317
      %p329 = scmp.eq.s32.totalorder %s29, 1
      %p330 = por %p328, %p329
      %p332 = scmp.ne.s32.totalorder %s317, %s331
      %p333 = scmp.eq.s32.totalorder %s29, 0
      %p334 = por %p332, %p333
      %s335 = ssub.s32 %s23, %s30
      %p336 = scmp.eq.s32.totalorder %s335, 0
      %s338 = sadd.s32 %s337, 1
      %s339 = scalar_select %p336, %s337, %s338
      %p342 = pneg %p336
      %p343 = scmp.eq.s32.totalorder %s23, 1
      %p344 = por %p342, %p343
      %p345 = scmp.ne.s32.totalorder %s337, %s340
      %p346 = scmp.eq.s32.totalorder %s23, 0
      %p347 = por %p345, %p346
      %p348 = scmp.ne.s32.totalorder %s337, %s340
      %p349 = scmp.eq.s32.totalorder %s28, 1
      %p350 = por %p348, %p349
      %p351 = scmp.ne.s32.totalorder %s340, %s341
      %p352 = scmp.eq.s32.totalorder %s28, 0
      %p353 = por %p351, %p352
      %p354 = scmp.ne.s32.totalorder %s340, %s341
      %p355 = scmp.eq.s32.totalorder %s29, 1
      %p356 = por %p354, %p355
      %p358 = scmp.ne.s32.totalorder %s341, %s357
      %p359 = scmp.eq.s32.totalorder %s29, 0
      %p360 = por %p358, %p359
      %p361 = scmp.le.s32.totalorder 1, %s23
      %p362 = scmp.lt.s32.totalorder %s23, 3
      %p363 = pnand %p361, %p362
      %p364 = pneg %p363
      // Predicated region
      $region9: #{tpu_custom_call.1} parent=5 // pred_check
        _
      $region10: #{tpu_custom_call.1} parent=5 // pred_check_branch
        %366 = sbr.rel (%p363) target = $region12
      $region11: #{tpu_custom_call.1} parent=5 // pred_region
        %s367 = ssub.s32 %s23, 1
        // Predicated region
        $region13: #{tpu_custom_call.1} parent=11 // pred_check
          %p368 = pneg %p96
        $region14: #{tpu_custom_call.1} parent=11 // pred_check_branch
          %370 = sbr.rel (%p368) target = $region16
        $region15: #{tpu_custom_call.1} parent=11 // pred_region
          _
        $region16: #{tpu_custom_call.1} parent=11 // pred_fallthru
          _
        // Predicated region
        $region17: #{tpu_custom_call.1} parent=11 // pred_check
          %p371 = pneg %p117
        $region18: #{tpu_custom_call.1} parent=11 // pred_check_branch
          %373 = sbr.rel (%p371) target = $region20
        $region19: #{tpu_custom_call.1} parent=11 // pred_region
          _
        $region20: #{tpu_custom_call.1} parent=11 // pred_fallthru
          _
        // Predicated region
        $region21: #{tpu_custom_call.1} parent=11 // pred_check
          %p374 = pneg %p138
        $region22: #{tpu_custom_call.1} parent=11 // pred_check_branch
          %376 = sbr.rel (%p374) target = $region24
        $region23: #{tpu_custom_call.1} parent=11 // pred_region
          _
        $region24: #{tpu_custom_call.1} parent=11 // pred_fallthru
          _
        // Predicated region
        $region25: #{tpu_custom_call.1} parent=11 // pred_check
          %p377 = pneg %p159
        $region26: #{tpu_custom_call.1} parent=11 // pred_check_branch
          %379 = sbr.rel (%p377) target = $region28
        $region27: #{tpu_custom_call.1} parent=11 // pred_region
          _
        $region28: #{tpu_custom_call.1} parent=11 // pred_fallthru
          _
        // Predicated region
        $region29: #{tpu_custom_call.1} parent=11 // pred_check
          %p380 = pneg %p180
        $region30: #{tpu_custom_call.1} parent=11 // pred_check_branch
          %382 = sbr.rel (%p380) target = $region32
        $region31: #{tpu_custom_call.1} parent=11 // pred_region
          _
        $region32: #{tpu_custom_call.1} parent=11 // pred_fallthru
          _
        // Predicated region
        $region33: #{tpu_custom_call.1} parent=11 // pred_check
          %p383 = pneg %p201
        $region34: #{tpu_custom_call.1} parent=11 // pred_check_branch
          %385 = sbr.rel (%p383) target = $region36
        $region35: #{tpu_custom_call.1} parent=11 // pred_region
          _
        $region36: #{tpu_custom_call.1} parent=11 // pred_fallthru
          _
        // Predicated region
        $region37: #{tpu_custom_call.1} parent=11 // pred_check
          %p386 = pneg %p222
        $region38: #{tpu_custom_call.1} parent=11 // pred_check_branch
          %388 = sbr.rel (%p386) target = $region40
        $region39: #{tpu_custom_call.1} parent=11 // pred_region
          _
        $region40: #{tpu_custom_call.1} parent=11 // pred_fallthru
          _
        // Predicated region
        $region41: #{tpu_custom_call.1} parent=11 // pred_check
          %p389 = pneg %p243
        $region42: #{tpu_custom_call.1} parent=11 // pred_check_branch
          %391 = sbr.rel (%p389) target = $region44
        $region43: #{tpu_custom_call.1} parent=11 // pred_region
          _
        $region44: #{tpu_custom_call.1} parent=11 // pred_fallthru
          _
        // Predicated region
        $region45: #{tpu_custom_call.1} parent=11 // pred_check
          %p392 = pneg %p264
        $region46: #{tpu_custom_call.1} parent=11 // pred_check_branch
          %394 = sbr.rel (%p392) target = $region48
        $region47: #{tpu_custom_call.1} parent=11 // pred_region
          _
        $region48: #{tpu_custom_call.1} parent=11 // pred_fallthru
          _
        // Predicated region
        $region49: #{tpu_custom_call.1} parent=11 // pred_check
          %p395 = pneg %p285
        $region50: #{tpu_custom_call.1} parent=11 // pred_check_branch
          %397 = sbr.rel (%p395) target = $region52
        $region51: #{tpu_custom_call.1} parent=11 // pred_region
          _
        $region52: #{tpu_custom_call.1} parent=11 // pred_fallthru
          _
        // Predicated region
        $region53: #{tpu_custom_call.1} parent=11 // pred_check
          %p398 = pneg %p306
        $region54: #{tpu_custom_call.1} parent=11 // pred_check_branch
          %400 = sbr.rel (%p398) target = $region56
        $region55: #{tpu_custom_call.1} parent=11 // pred_region
          _
        $region56: #{tpu_custom_call.1} parent=11 // pred_fallthru
          _
        // Predicated region
        $region57: #{tpu_custom_call.1} parent=11 // pred_check
          %p401 = pneg %p327
        $region58: #{tpu_custom_call.1} parent=11 // pred_check_branch
          %403 = sbr.rel (%p401) target = $region60
        $region59: #{tpu_custom_call.1} parent=11 // pred_region
          _
        $region60: #{tpu_custom_call.1} parent=11 // pred_fallthru
          _
      $region12: #{tpu_custom_call.1} parent=5 // pred_fallthru
        _
      %p404 = scmp.lt.s32.totalorder %s23, 2
      // Predicated region
      $region61: #{tpu_custom_call.1} parent=5 // pred_check
        %p405 = pneg %p404
      $region62: #{tpu_custom_call.1} parent=5 // pred_check_branch
        %407 = sbr.rel (%p405) target = $region64
      $region63: #{tpu_custom_call.1} parent=5 // pred_region
        // Predicated region
        $region65: #{tpu_custom_call.1} parent=63 // pred_check
          %p408 = pneg %p43
        $region66: #{tpu_custom_call.1} parent=63 // pred_check_branch
          %410 = sbr.rel (%p408) target = $region68
        $region67: #{tpu_custom_call.1} parent=63 // pred_region
          %p411 = scmp.lt.s32.totalorder %s23, 1
          %s412 = scalar_select %p411, %s23, 1
          %s413 = smul.addr %s412, 8
          %s414 = scalar_lea.vmem %s0, %s413
        $region68: #{tpu_custom_call.1} parent=63 // pred_fallthru
          _
        // Predicated region
        $region69: #{tpu_custom_call.1} parent=63 // pred_check
          %p415 = pneg %p69
        $region70: #{tpu_custom_call.1} parent=63 // pred_check_branch
          %417 = sbr.rel (%p415) target = $region72
        $region71: #{tpu_custom_call.1} parent=63 // pred_region
          %p418 = scmp.lt.s32.totalorder %s23, 1
          %s419 = scalar_select %p418, %s23, 1
          %s420 = scalar_lea.vmem %s1, %s419
        $region72: #{tpu_custom_call.1} parent=63 // pred_fallthru
          _
      $region64: #{tpu_custom_call.1} parent=5 // pred_fallthru
        _
      %p421 = scmp.le.s32.totalorder 1, %s23
      %p422 = scmp.lt.s32.totalorder %s23, 3
      %p423 = pnand %p421, %p422
      %p424 = pneg %p423
      // Predicated region
      $region73: #{tpu_custom_call.1} parent=5 // pred_check
        _
      $region74: #{tpu_custom_call.1} parent=5 // pred_check_branch
        %426 = sbr.rel (%p423) target = $region76
      $region75: #{tpu_custom_call.1} parent=5 // pred_region
        %s427 = ssub.s32 %s23, 1
        %p428 = scmp.lt.s32.totalorder %s28, 1
        %s429 = scalar_select %p428, %s28, 1
        %s430 = smul.addr %s429, 8
        %s431 = scalar_lea.vmem %s0, %s430
        %p432 = pneg %p49
        %p433 = pneg %p46
        %p434 = scmp.lt.s32.totalorder %s28, 1
        %s435 = scalar_select %p434, %s28, 1
        %s436 = scalar_lea.vmem %s1, %s435
        %p437 = pneg %p75
        %p438 = pneg %p72
        %p439 = pneg %p96
        %p440 = pneg %p93
        %p441 = pneg %p117
        %p442 = pneg %p114
        %p443 = pneg %p138
        %p444 = pneg %p135
        %p445 = pneg %p159
        %p446 = pneg %p156
        %p447 = pneg %p180
        %p448 = pneg %p177
        %p449 = pneg %p201
        %p450 = pneg %p198
        %p451 = pneg %p222
        %p452 = pneg %p219
        %p453 = pneg %p243
        %p454 = pneg %p240
        %p455 = pneg %p264
        %p456 = pneg %p261
        %p457 = pneg %p285
        %p458 = pneg %p282
        %p459 = pneg %p306
        %p460 = pneg %p303
        %p461 = pneg %p327
        %p462 = pneg %p324
        %p463 = pneg %p353
        %p464 = pneg %p350
        %s465 = sand.u32 %s340, 1
        %s466 = scalar_lea.sflag [#allocation3], %s465
        %s467 = sand.u32 %s340, 1
        %s468 = smul.addr %s467, 8
        %s469 = scalar_lea.vmem [#allocation2], %s468
        %p470 = scmp.lt.s32.totalorder %s28, 1
        %s471 = scalar_select %p470, %s28, 1
        %s472 = smul.addr %s471, 8
        %s473 = scalar_lea.vmem %s0, %s472
        %p474 = scmp.lt.s32.totalorder %s28, 1
        %s475 = scalar_select %p474, %s28, 1
        %s476 = scalar_lea.vmem %s1, %s475
        %v477 = vld [vmem:[%s473] sm:$0xff]
        %v478 = vld [vmem:[%s2] sm:$0x1]
        %v479 = vld [vmem:[%s3] sm:$0x1]
        %vm480 = vcmask 261120
        %v481 = vsel %vm480, %v477, 0.0
        %482 = vadd.xlane.f32.xlu0 %v481
        %v483 = vpop.xlane.xlu0 %482
        %v484 = vrcp.pop 32.0
        %v485 = vmul.f32 %v483, %v484
        %v486 = vsub.f32 %v477, %v485
        %v487 = vmul.f32 %v486, %v486
        %v488 = vsel %vm480, %v487, 0.0
        %489 = vadd.xlane.f32.xlu0 %v488
        %v490 = vpop.xlane.xlu0 %489
        %v491 = vmul.f32 %v490, %v484
        %v492 = vadd.f32 %v491, 1e-05
        %v493 = vrsqrt.pop %v492
        %v494 = vmul.f32 %v486, %v493
        %v496 = vlaneseq
        %v497 = vshrl.u32 %v496, 7
        %v498 = vsub.s32 0, %v497
        %v499 = vrot.slane %v478, %v498
        %v501 = vmul.f32 %v494, %v499
        %v503 = vlaneseq
        %v504 = vshrl.u32 %v503, 7
        %v505 = vsub.s32 0, %v504
        %v506 = vrot.slane %v479, %v505
        %v508 = vadd.f32 %v501, %v506
        %v509 = vld [vmem:[%s4] sm:$0xff]
        %v510 = vld [vmem:[%s4 + $0x8] sm:$0xff]
        %v511 = vld [vmem:[%s4 + $0x10] sm:$0xff]
        %v512 = vld [vmem:[%s4 + $0x18] sm:$0xff]
        %v513 = vld [vmem:[%s5] sm:$0x1]
        %v515 = vlaneseq
        %v516 = vshrl.u32 %v515, 7
        %v517 = vsub.s32 0, %v516
        %v518 = vrot.slane %v513, %v517
        %v521 = vsel %vm480, %v508, 0
        %523 = vmatprep.subr.mxu0 0.0
        %524 = vmatpush1.msra.mxu0 %v509
        %525 = vmatprep.subr.mxu0 0.0
        %526 = vmatpush1.msra.mxu0 %v510
        %527 = vmatprep.subr.mxu0 0.0
        %528 = vmatpush1.msra.mxu0 %v511
        %529 = vmatprep.subr.mxu0 0.0
        %530 = vmatpush1.msra.mxu0 %v512
        %531 = vmatprep.subr.mxu0 0.0
        %532 = vmatpush1.msra.mxu0 0.0
        %533 = vmatprep.subr.mxu0 0.0
        %534 = vmatpush1.msra.mxu0 0.0
        %535 = vmatprep.subr.mxu0 0.0
        %536 = vmatpush1.msra.mxu0 0.0
        %537 = vmatprep.subr.mxu0 0.0
        %538 = vmatpush1.msra.mxu0 0.0
        %539 = vmatprep.subr.mxu0 0.0
        %540 = vmatpush1.msra.mxu0 0.0
        %541 = vmatprep.subr.mxu0 0.0
        %542 = vmatpush1.msra.mxu0 0.0
        %543 = vmatprep.subr.mxu0 0.0
        %544 = vmatpush1.msra.mxu0 0.0
        %545 = vmatprep.subr.mxu0 0.0
        %546 = vmatpush1.msra.mxu0 0.0
        %547 = vmatprep.subr.mxu0 0.0
        %548 = vmatpush1.msra.mxu0 0.0
        %549 = vmatprep.subr.mxu0 0.0
        %550 = vmatpush1.msra.mxu0 0.0
        %551 = vmatprep.subr.mxu0 0.0
        %552 = vmatpush1.msra.mxu0 0.0
        %553 = vmatprep.subr.mxu0 0.0
        %554 = vmatpush1.msra.mxu0 0.0
        %555 = vmatprep.subr.mxu0 0.0
        %556 = vmatpush1.msra.mxu0 0.0
        %557 = vmatprep.subr.mxu0 0.0
        %558 = vmatpush1.msra.mxu0 0.0
        %559 = vmatprep.subr.mxu0 0.0
        %560 = vmatpush1.msra.mxu0 0.0
        %561 = vmatprep.subr.mxu0 0.0
        %562 = vmatpush1.msra.mxu0 0.0
        %563 = vmatprep.subr.mxu0 0.0
        %564 = vmatpush1.msra.mxu0 0.0
        %565 = vmatprep.subr.mxu0 0.0
        %566 = vmatpush1.msra.mxu0 0.0
        %567 = vmatprep.subr.mxu0 0.0
        %568 = vmatpush1.msra.mxu0 0.0
        %569 = vmatprep.subr.mxu0 0.0
        %570 = vmatpush1.msra.mxu0 0.0
        %571 = vmatprep.subr.mxu0 0.0
        %572 = vmatpush1.msra.mxu0 0.0
        %573 = vmatprep.subr.mxu0 0.0
        %574 = vmatpush1.msra.mxu0 0.0
        %575 = vmatprep.subr.mxu0 0.0
        %576 = vmatpush1.msra.mxu0 0.0
        %577 = vmatprep.subr.mxu0 0.0
        %578 = vmatpush1.msra.mxu0 0.0
        %579 = vmatprep.subr.mxu0 0.0
        %580 = vmatpush1.msra.mxu0 0.0
        %581 = vmatprep.subr.mxu0 0.0
        %582 = vmatpush1.msra.mxu0 0.0
        %583 = vmatprep.subr.mxu0 0.0
        %584 = vmatpush1.msra.mxu0 0.0
        %585 = vmatprep.subr.mxu0 0.0
        %586 = vmatpush1.msra.mxu0 0.0
        %587 = vmatprep.mubr.f32.mxu0 0.0
        %588 = vmatmul.mubr.f32.gmra.mrb[0].mxu0 %v521
        %v589 = vpop.f32.mrb[0].mxu0
        %v590 = vadd.f32 %v518, %v589
        %v591 = vpop.f32.mrb[0].mxu0
        %592 = vdwg.mxu0
        %v593 = vld [vmem:[%s476] sm:$0x1]
        %vm594 = vcmp.gt.s32.totalorder %v593, 0
        %v595 = vsel %vm594, -1e+30, 0.0
        %597 = vrot.lane.b32.xlu0 %v590, 96
        %v598 = vpop.permute.xlu0 %597
        %vm599 = vcmask 64512
        %v600 = vsel %vm599, %v590, 0
        %v602 = vsel %vm599, %v598, 0
        %604 = vmatprep.subr.mxu0 0.0
        %605 = vmatpush1.xpose.msra.mxu0 %v602
        %606 = vmatprep.subr.mxu0 0.0
        %607 = vmatpush1.xpose.msra.mxu0 0.0
        %608 = vmatprep.subr.mxu0 0.0
        %609 = vmatpush1.xpose.msra.mxu0 0.0
        %610 = vmatprep.subr.mxu0 0.0
        %611 = vmatpush1.xpose.msra.mxu0 0.0
        %612 = vmatprep.subr.mxu0 0.0
        %613 = vmatpush1.xpose.msra.mxu0 0.0
        %614 = vmatprep.subr.mxu0 0.0
        %615 = vmatpush1.xpose.msra.mxu0 0.0
        %616 = vmatprep.subr.mxu0 0.0
        %617 = vmatpush1.xpose.msra.mxu0 0.0
        %618 = vmatprep.subr.mxu0 0.0
        %619 = vmatpush1.xpose.msra.mxu0 0.0
        %620 = vmatprep.subr.mxu0 0.0
        %621 = vmatpush1.xpose.msra.mxu0 0.0
        %622 = vmatprep.subr.mxu0 0.0
        %623 = vmatpush1.xpose.msra.mxu0 0.0
        %624 = vmatprep.subr.mxu0 0.0
        %625 = vmatpush1.xpose.msra.mxu0 0.0
        %626 = vmatprep.subr.mxu0 0.0
        %627 = vmatpush1.xpose.msra.mxu0 0.0
        %628 = vmatprep.subr.mxu0 0.0
        %629 = vmatpush1.xpose.msra.mxu0 0.0
        %630 = vmatprep.subr.mxu0 0.0
        %631 = vmatpush1.xpose.msra.mxu0 0.0
        %632 = vmatprep.subr.mxu0 0.0
        %633 = vmatpush1.xpose.msra.mxu0 0.0
        %634 = vmatprep.subr.mxu0 0.0
        %635 = vmatpush1.xpose.msra.mxu0 0.0
        %636 = vmatprep.subr.mxu0 0.0
        %637 = vmatpush1.xpose.msra.mxu0 0.0
        %638 = vmatprep.subr.mxu0 0.0
        %639 = vmatpush1.xpose.msra.mxu0 0.0
        %640 = vmatprep.subr.mxu0 0.0
        %641 = vmatpush1.xpose.msra.mxu0 0.0
        %642 = vmatprep.subr.mxu0 0.0
        %643 = vmatpush1.xpose.msra.mxu0 0.0
        %644 = vmatprep.subr.mxu0 0.0
        %645 = vmatpush1.xpose.msra.mxu0 0.0
        %646 = vmatprep.subr.mxu0 0.0
        %647 = vmatpush1.xpose.msra.mxu0 0.0
        %648 = vmatprep.subr.mxu0 0.0
        %649 = vmatpush1.xpose.msra.mxu0 0.0
        %650 = vmatprep.subr.mxu0 0.0
        %651 = vmatpush1.xpose.msra.mxu0 0.0
        %652 = vmatprep.subr.mxu0 0.0
        %653 = vmatpush1.xpose.msra.mxu0 0.0
        %654 = vmatprep.subr.mxu0 0.0
        %655 = vmatpush1.xpose.msra.mxu0 0.0
        %656 = vmatprep.subr.mxu0 0.0
        %657 = vmatpush1.xpose.msra.mxu0 0.0
        %658 = vmatprep.subr.mxu0 0.0
        %659 = vmatpush1.xpose.msra.mxu0 0.0
        %660 = vmatprep.subr.mxu0 0.0
        %661 = vmatpush1.xpose.msra.mxu0 0.0
        %662 = vmatprep.subr.mxu0 0.0
        %663 = vmatpush1.xpose.msra.mxu0 0.0
        %664 = vmatprep.subr.mxu0 0.0
        %665 = vmatpush1.xpose.msra.mxu0 0.0
        %666 = vmatprep.subr.mxu0 0.0
        %667 = vmatpush1.xpose.msra.mxu0 0.0
        %668 = vmatprep.mubr.f32.mxu0 0.0
        %669 = vmatmul.mubr.f32.gmra.mrb[0].mxu0 %v600
        %v670 = vpop.f32.mrb[0].mxu0
        %v671 = vadd.f32 0.0, %v670
        %v672 = vpop.f32.mrb[0].mxu0
        %673 = vdwg.mxu0
        %v674 = vmul.f32 %v671, 0.35355338
        %v676 = vlaneseq
        %v677 = vshrl.u32 %v676, 7
        %v678 = vsub.s32 0, %v677
        %v679 = vrot.slane %v595, %v678
        %v681 = vadd.f32 %v674, %v679
        %v682 = vsel %vm599, %v681, -inf
        %683 = vmax.xlane.f32.xlu0 %v682
        %v684 = vpop.xlane.xlu0 %683
        %v685 = vsub.f32 %v681, %v684
        %v686 = vmul.f32 %v685, 1.442695
        %v687 = vpow.pop %v686
        %v688 = vsel %vm599, %v687, 0.0
        %689 = vadd.xlane.f32.xlu0 %v688
        %v690 = vpop.xlane.xlu0 %689
        %v691 = vrcp.pop %v690
        %v692 = vmul.f32 %v687, %v691
        %693 = vrot.lane.b32.xlu0 %v590, 64
        %v694 = vpop.permute.xlu0 %693
        %v697 = vsel %vm599, %v692, 0
        %699 = vmatprep.subr.mxu0 0.0
        %700 = vmatpush1.msra.mxu0 %v694
        %701 = vmatprep.subr.mxu0 0.0
        %702 = vmatpush1.msra.mxu0 0.0
        %703 = vmatprep.subr.mxu0 0.0
        %704 = vmatpush1.msra.mxu0 0.0
        %705 = vmatprep.subr.mxu0 0.0
        %706 = vmatpush1.msra.mxu0 0.0
        %707 = vmatprep.subr.mxu0 0.0
        %708 = vmatpush1.msra.mxu0 0.0
        %709 = vmatprep.subr.mxu0 0.0
        %710 = vmatpush1.msra.mxu0 0.0
        %711 = vmatprep.subr.mxu0 0.0
        %712 = vmatpush1.msra.mxu0 0.0
        %713 = vmatprep.subr.mxu0 0.0
        %714 = vmatpush1.msra.mxu0 0.0
        %715 = vmatprep.subr.mxu0 0.0
        %716 = vmatpush1.msra.mxu0 0.0
        %717 = vmatprep.subr.mxu0 0.0
        %718 = vmatpush1.msra.mxu0 0.0
        %719 = vmatprep.subr.mxu0 0.0
        %720 = vmatpush1.msra.mxu0 0.0
        %721 = vmatprep.subr.mxu0 0.0
        %722 = vmatpush1.msra.mxu0 0.0
        %723 = vmatprep.subr.mxu0 0.0
        %724 = vmatpush1.msra.mxu0 0.0
        %725 = vmatprep.subr.mxu0 0.0
        %726 = vmatpush1.msra.mxu0 0.0
        %727 = vmatprep.subr.mxu0 0.0
        %728 = vmatpush1.msra.mxu0 0.0
        %729 = vmatprep.subr.mxu0 0.0
        %730 = vmatpush1.msra.mxu0 0.0
        %731 = vmatprep.subr.mxu0 0.0
        %732 = vmatpush1.msra.mxu0 0.0
        %733 = vmatprep.subr.mxu0 0.0
        %734 = vmatpush1.msra.mxu0 0.0
        %735 = vmatprep.subr.mxu0 0.0
        %736 = vmatpush1.msra.mxu0 0.0
        %737 = vmatprep.subr.mxu0 0.0
        %738 = vmatpush1.msra.mxu0 0.0
        %739 = vmatprep.subr.mxu0 0.0
        %740 = vmatpush1.msra.mxu0 0.0
        %741 = vmatprep.subr.mxu0 0.0
        %742 = vmatpush1.msra.mxu0 0.0
        %743 = vmatprep.subr.mxu0 0.0
        %744 = vmatpush1.msra.mxu0 0.0
        %745 = vmatprep.subr.mxu0 0.0
        %746 = vmatpush1.msra.mxu0 0.0
        %747 = vmatprep.subr.mxu0 0.0
        %748 = vmatpush1.msra.mxu0 0.0
        %749 = vmatprep.subr.mxu0 0.0
        %750 = vmatpush1.msra.mxu0 0.0
        %751 = vmatprep.subr.mxu0 0.0
        %752 = vmatpush1.msra.mxu0 0.0
        %753 = vmatprep.subr.mxu0 0.0
        %754 = vmatpush1.msra.mxu0 0.0
        %755 = vmatprep.subr.mxu0 0.0
        %756 = vmatpush1.msra.mxu0 0.0
        %757 = vmatprep.subr.mxu0 0.0
        %758 = vmatpush1.msra.mxu0 0.0
        %759 = vmatprep.subr.mxu0 0.0
        %760 = vmatpush1.msra.mxu0 0.0
        %761 = vmatprep.subr.mxu0 0.0
        %762 = vmatpush1.msra.mxu0 0.0
        %763 = vmatprep.mubr.f32.mxu0 0.0
        %764 = vmatmul.mubr.f32.gmra.mrb[0].mxu0 %v697
        %v765 = vpop.f32.mrb[0].mxu0
        %v766 = vadd.f32 0.0, %v765
        %v767 = vpop.f32.mrb[0].mxu0
        %768 = vdwg.mxu0
        %769 = vrot.lane.b32.xlu0 %v590, 120
        %v770 = vpop.permute.xlu0 %769
        %771 = vrot.lane.b32.xlu0 %v590, 88
        %v772 = vpop.permute.xlu0 %771
        %v773 = vsel %vm599, %v770, 0
        %v775 = vsel %vm599, %v772, 0
        %777 = vmatprep.subr.mxu0 0.0
        %778 = vmatpush1.xpose.msra.mxu0 %v775
        %779 = vmatprep.subr.mxu0 0.0
        %780 = vmatpush1.xpose.msra.mxu0 0.0
        %781 = vmatprep.subr.mxu0 0.0
        %782 = vmatpush1.xpose.msra.mxu0 0.0
        %783 = vmatprep.subr.mxu0 0.0
        %784 = vmatpush1.xpose.msra.mxu0 0.0
        %785 = vmatprep.subr.mxu0 0.0
        %786 = vmatpush1.xpose.msra.mxu0 0.0
        %787 = vmatprep.subr.mxu0 0.0
        %788 = vmatpush1.xpose.msra.mxu0 0.0
        %789 = vmatprep.subr.mxu0 0.0
        %790 = vmatpush1.xpose.msra.mxu0 0.0
        %791 = vmatprep.subr.mxu0 0.0
        %792 = vmatpush1.xpose.msra.mxu0 0.0
        %793 = vmatprep.subr.mxu0 0.0
        %794 = vmatpush1.xpose.msra.mxu0 0.0
        %795 = vmatprep.subr.mxu0 0.0
        %796 = vmatpush1.xpose.msra.mxu0 0.0
        %797 = vmatprep.subr.mxu0 0.0
        %798 = vmatpush1.xpose.msra.mxu0 0.0
        %799 = vmatprep.subr.mxu0 0.0
        %800 = vmatpush1.xpose.msra.mxu0 0.0
        %801 = vmatprep.subr.mxu0 0.0
        %802 = vmatpush1.xpose.msra.mxu0 0.0
        %803 = vmatprep.subr.mxu0 0.0
        %804 = vmatpush1.xpose.msra.mxu0 0.0
        %805 = vmatprep.subr.mxu0 0.0
        %806 = vmatpush1.xpose.msra.mxu0 0.0
        %807 = vmatprep.subr.mxu0 0.0
        %808 = vmatpush1.xpose.msra.mxu0 0.0
        %809 = vmatprep.subr.mxu0 0.0
        %810 = vmatpush1.xpose.msra.mxu0 0.0
        %811 = vmatprep.subr.mxu0 0.0
        %812 = vmatpush1.xpose.msra.mxu0 0.0
        %813 = vmatprep.subr.mxu0 0.0
        %814 = vmatpush1.xpose.msra.mxu0 0.0
        %815 = vmatprep.subr.mxu0 0.0
        %816 = vmatpush1.xpose.msra.mxu0 0.0
        %817 = vmatprep.subr.mxu0 0.0
        %818 = vmatpush1.xpose.msra.mxu0 0.0
        %819 = vmatprep.subr.mxu0 0.0
        %820 = vmatpush1.xpose.msra.mxu0 0.0
        %821 = vmatprep.subr.mxu0 0.0
        %822 = vmatpush1.xpose.msra.mxu0 0.0
        %823 = vmatprep.subr.mxu0 0.0
        %824 = vmatpush1.xpose.msra.mxu0 0.0
        %825 = vmatprep.subr.mxu0 0.0
        %826 = vmatpush1.xpose.msra.mxu0 0.0
        %827 = vmatprep.subr.mxu0 0.0
        %828 = vmatpush1.xpose.msra.mxu0 0.0
        %829 = vmatprep.subr.mxu0 0.0
        %830 = vmatpush1.xpose.msra.mxu0 0.0
        %831 = vmatprep.subr.mxu0 0.0
        %832 = vmatpush1.xpose.msra.mxu0 0.0
        %833 = vmatprep.subr.mxu0 0.0
        %834 = vmatpush1.xpose.msra.mxu0 0.0
        %835 = vmatprep.subr.mxu0 0.0
        %836 = vmatpush1.xpose.msra.mxu0 0.0
        %837 = vmatprep.subr.mxu0 0.0
        %838 = vmatpush1.xpose.msra.mxu0 0.0
        %839 = vmatprep.subr.mxu0 0.0
        %840 = vmatpush1.xpose.msra.mxu0 0.0
        %841 = vmatprep.mubr.f32.mxu0 0.0
        %842 = vmatmul.mubr.f32.gmra.mrb[0].mxu0 %v773
        %v843 = vpop.f32.mrb[0].mxu0
        %v844 = vadd.f32 0.0, %v843
        %v845 = vpop.f32.mrb[0].mxu0
        %846 = vdwg.mxu0
        %v847 = vmul.f32 %v844, 0.35355338
        %v848 = vadd.f32 %v847, %v679
        %v849 = vsel %vm599, %v848, -inf
        %850 = vmax.xlane.f32.xlu0 %v849
        %v851 = vpop.xlane.xlu0 %850
        %v852 = vsub.f32 %v848, %v851
        %v853 = vmul.f32 %v852, 1.442695
        %v854 = vpow.pop %v853
        %v855 = vsel %vm599, %v854, 0.0
        %856 = vadd.xlane.f32.xlu0 %v855
        %v857 = vpop.xlane.xlu0 %856
        %v858 = vrcp.pop %v857
        %v859 = vmul.f32 %v854, %v858
        %860 = vrot.lane.b32.xlu0 %v590, 56
        %v861 = vpop.permute.xlu0 %860
        %v864 = vsel %vm599, %v859, 0
        %866 = vmatprep.subr.mxu0 0.0
        %867 = vmatpush1.msra.mxu0 %v861
        %868 = vmatprep.subr.mxu0 0.0
        %869 = vmatpush1.msra.mxu0 0.0
        %870 = vmatprep.subr.mxu0 0.0
        %871 = vmatpush1.msra.mxu0 0.0
        %872 = vmatprep.subr.mxu0 0.0
        %873 = vmatpush1.msra.mxu0 0.0
        %874 = vmatprep.subr.mxu0 0.0
        %875 = vmatpush1.msra.mxu0 0.0
        %876 = vmatprep.subr.mxu0 0.0
        %877 = vmatpush1.msra.mxu0 0.0
        %878 = vmatprep.subr.mxu0 0.0
        %879 = vmatpush1.msra.mxu0 0.0
        %880 = vmatprep.subr.mxu0 0.0
        %881 = vmatpush1.msra.mxu0 0.0
        %882 = vmatprep.subr.mxu0 0.0
        %883 = vmatpush1.msra.mxu0 0.0
        %884 = vmatprep.subr.mxu0 0.0
        %885 = vmatpush1.msra.mxu0 0.0
        %886 = vmatprep.subr.mxu0 0.0
        %887 = vmatpush1.msra.mxu0 0.0
        %888 = vmatprep.subr.mxu0 0.0
        %889 = vmatpush1.msra.mxu0 0.0
        %890 = vmatprep.subr.mxu0 0.0
        %891 = vmatpush1.msra.mxu0 0.0
        %892 = vmatprep.subr.mxu0 0.0
        %893 = vmatpush1.msra.mxu0 0.0
        %894 = vmatprep.subr.mxu0 0.0
        %895 = vmatpush1.msra.mxu0 0.0
        %896 = vmatprep.subr.mxu0 0.0
        %897 = vmatpush1.msra.mxu0 0.0
        %898 = vmatprep.subr.mxu0 0.0
        %899 = vmatpush1.msra.mxu0 0.0
        %900 = vmatprep.subr.mxu0 0.0
        %901 = vmatpush1.msra.mxu0 0.0
        %902 = vmatprep.subr.mxu0 0.0
        %903 = vmatpush1.msra.mxu0 0.0
        %904 = vmatprep.subr.mxu0 0.0
        %905 = vmatpush1.msra.mxu0 0.0
        %906 = vmatprep.subr.mxu0 0.0
        %907 = vmatpush1.msra.mxu0 0.0
        %908 = vmatprep.subr.mxu0 0.0
        %909 = vmatpush1.msra.mxu0 0.0
        %910 = vmatprep.subr.mxu0 0.0
        %911 = vmatpush1.msra.mxu0 0.0
        %912 = vmatprep.subr.mxu0 0.0
        %913 = vmatpush1.msra.mxu0 0.0
        %914 = vmatprep.subr.mxu0 0.0
        %915 = vmatpush1.msra.mxu0 0.0
        %916 = vmatprep.subr.mxu0 0.0
        %917 = vmatpush1.msra.mxu0 0.0
        %918 = vmatprep.subr.mxu0 0.0
        %919 = vmatpush1.msra.mxu0 0.0
        %920 = vmatprep.subr.mxu0 0.0
        %921 = vmatpush1.msra.mxu0 0.0
        %922 = vmatprep.subr.mxu0 0.0
        %923 = vmatpush1.msra.mxu0 0.0
        %924 = vmatprep.subr.mxu0 0.0
        %925 = vmatpush1.msra.mxu0 0.0
        %926 = vmatprep.subr.mxu0 0.0
        %927 = vmatpush1.msra.mxu0 0.0
        %928 = vmatprep.subr.mxu0 0.0
        %929 = vmatpush1.msra.mxu0 0.0
        %930 = vmatprep.mubr.f32.mxu0 0.0
        %931 = vmatmul.mubr.f32.gmra.mrb[0].mxu0 %v864
        %v932 = vpop.f32.mrb[0].mxu0
        %v933 = vadd.f32 0.0, %v932
        %v934 = vpop.f32.mrb[0].mxu0
        %935 = vdwg.mxu0
        %936 = vrot.lane.b32.xlu0 %v590, 112
        %v937 = vpop.permute.xlu0 %936
        %938 = vrot.lane.b32.xlu0 %v590, 80
        %v939 = vpop.permute.xlu0 %938
        %v940 = vsel %vm599, %v937, 0
        %v942 = vsel %vm599, %v939, 0
        %944 = vmatprep.subr.mxu0 0.0
        %945 = vmatpush1.xpose.msra.mxu0 %v942
        %946 = vmatprep.subr.mxu0 0.0
        %947 = vmatpush1.xpose.msra.mxu0 0.0
        %948 = vmatprep.subr.mxu0 0.0
        %949 = vmatpush1.xpose.msra.mxu0 0.0
        %950 = vmatprep.subr.mxu0 0.0
        %951 = vmatpush1.xpose.msra.mxu0 0.0
        %952 = vmatprep.subr.mxu0 0.0
        %953 = vmatpush1.xpose.msra.mxu0 0.0
        %954 = vmatprep.subr.mxu0 0.0
        %955 = vmatpush1.xpose.msra.mxu0 0.0
        %956 = vmatprep.subr.mxu0 0.0
        %957 = vmatpush1.xpose.msra.mxu0 0.0
        %958 = vmatprep.subr.mxu0 0.0
        %959 = vmatpush1.xpose.msra.mxu0 0.0
        %960 = vmatprep.subr.mxu0 0.0
        %961 = vmatpush1.xpose.msra.mxu0 0.0
        %962 = vmatprep.subr.mxu0 0.0
        %963 = vmatpush1.xpose.msra.mxu0 0.0
        %964 = vmatprep.subr.mxu0 0.0
        %965 = vmatpush1.xpose.msra.mxu0 0.0
        %966 = vmatprep.subr.mxu0 0.0
        %967 = vmatpush1.xpose.msra.mxu0 0.0
        %968 = vmatprep.subr.mxu0 0.0
        %969 = vmatpush1.xpose.msra.mxu0 0.0
        %970 = vmatprep.subr.mxu0 0.0
        %971 = vmatpush1.xpose.msra.mxu0 0.0
        %972 = vmatprep.subr.mxu0 0.0
        %973 = vmatpush1.xpose.msra.mxu0 0.0
        %974 = vmatprep.subr.mxu0 0.0
        %975 = vmatpush1.xpose.msra.mxu0 0.0
        %976 = vmatprep.subr.mxu0 0.0
        %977 = vmatpush1.xpose.msra.mxu0 0.0
        %978 = vmatprep.subr.mxu0 0.0
        %979 = vmatpush1.xpose.msra.mxu0 0.0
        %980 = vmatprep.subr.mxu0 0.0
        %981 = vmatpush1.xpose.msra.mxu0 0.0
        %982 = vmatprep.subr.mxu0 0.0
        %983 = vmatpush1.xpose.msra.mxu0 0.0
        %984 = vmatprep.subr.mxu0 0.0
        %985 = vmatpush1.xpose.msra.mxu0 0.0
        %986 = vmatprep.subr.mxu0 0.0
        %987 = vmatpush1.xpose.msra.mxu0 0.0
        %988 = vmatprep.subr.mxu0 0.0
        %989 = vmatpush1.xpose.msra.mxu0 0.0
        %990 = vmatprep.subr.mxu0 0.0
        %991 = vmatpush1.xpose.msra.mxu0 0.0
        %992 = vmatprep.subr.mxu0 0.0
        %993 = vmatpush1.xpose.msra.mxu0 0.0
        %994 = vmatprep.subr.mxu0 0.0
        %995 = vmatpush1.xpose.msra.mxu0 0.0
        %996 = vmatprep.subr.mxu0 0.0
        %997 = vmatpush1.xpose.msra.mxu0 0.0
        %998 = vmatprep.subr.mxu0 0.0
        %999 = vmatpush1.xpose.msra.mxu0 0.0
        %1000 = vmatprep.subr.mxu0 0.0
        %1001 = vmatpush1.xpose.msra.mxu0 0.0
        %1002 = vmatprep.subr.mxu0 0.0
        %1003 = vmatpush1.xpose.msra.mxu0 0.0
        %1004 = vmatprep.subr.mxu0 0.0
        %1005 = vmatpush1.xpose.msra.mxu0 0.0
        %1006 = vmatprep.subr.mxu0 0.0
        %1007 = vmatpush1.xpose.msra.mxu0 0.0
        %1008 = vmatprep.mubr.f32.mxu0 0.0
        %1009 = vmatmul.mubr.f32.gmra.mrb[0].mxu0 %v940
        %v1010 = vpop.f32.mrb[0].mxu0
        %v1011 = vadd.f32 0.0, %v1010
        %v1012 = vpop.f32.mrb[0].mxu0
        %1013 = vdwg.mxu0
        %v1014 = vmul.f32 %v1011, 0.35355338
        %v1015 = vadd.f32 %v1014, %v679
        %v1016 = vsel %vm599, %v1015, -inf
        %1017 = vmax.xlane.f32.xlu0 %v1016
        %v1018 = vpop.xlane.xlu0 %1017
        %v1019 = vsub.f32 %v1015, %v1018
        %v1020 = vmul.f32 %v1019, 1.442695
        %v1021 = vpow.pop %v1020
        %v1022 = vsel %vm599, %v1021, 0.0
        %1023 = vadd.xlane.f32.xlu0 %v1022
        %v1024 = vpop.xlane.xlu0 %1023
        %v1025 = vrcp.pop %v1024
        %v1026 = vmul.f32 %v1021, %v1025
        %1027 = vrot.lane.b32.xlu0 %v590, 48
        %v1028 = vpop.permute.xlu0 %1027
        %v1031 = vsel %vm599, %v1026, 0
        %1033 = vmatprep.subr.mxu0 0.0
        %1034 = vmatpush1.msra.mxu0 %v1028
        %1035 = vmatprep.subr.mxu0 0.0
        %1036 = vmatpush1.msra.mxu0 0.0
        %1037 = vmatprep.subr.mxu0 0.0
        %1038 = vmatpush1.msra.mxu0 0.0
        %1039 = vmatprep.subr.mxu0 0.0
        %1040 = vmatpush1.msra.mxu0 0.0
        %1041 = vmatprep.subr.mxu0 0.0
        %1042 = vmatpush1.msra.mxu0 0.0
        %1043 = vmatprep.subr.mxu0 0.0
        %1044 = vmatpush1.msra.mxu0 0.0
        %1045 = vmatprep.subr.mxu0 0.0
        %1046 = vmatpush1.msra.mxu0 0.0
        %1047 = vmatprep.subr.mxu0 0.0
        %1048 = vmatpush1.msra.mxu0 0.0
        %1049 = vmatprep.subr.mxu0 0.0
        %1050 = vmatpush1.msra.mxu0 0.0
        %1051 = vmatprep.subr.mxu0 0.0
        %1052 = vmatpush1.msra.mxu0 0.0
        %1053 = vmatprep.subr.mxu0 0.0
        %1054 = vmatpush1.msra.mxu0 0.0
        %1055 = vmatprep.subr.mxu0 0.0
        %1056 = vmatpush1.msra.mxu0 0.0
        %1057 = vmatprep.subr.mxu0 0.0
        %1058 = vmatpush1.msra.mxu0 0.0
        %1059 = vmatprep.subr.mxu0 0.0
        %1060 = vmatpush1.msra.mxu0 0.0
        %1061 = vmatprep.subr.mxu0 0.0
        %1062 = vmatpush1.msra.mxu0 0.0
        %1063 = vmatprep.subr.mxu0 0.0
        %1064 = vmatpush1.msra.mxu0 0.0
        %1065 = vmatprep.subr.mxu0 0.0
        %1066 = vmatpush1.msra.mxu0 0.0
        %1067 = vmatprep.subr.mxu0 0.0
        %1068 = vmatpush1.msra.mxu0 0.0
        %1069 = vmatprep.subr.mxu0 0.0
        %1070 = vmatpush1.msra.mxu0 0.0
        %1071 = vmatprep.subr.mxu0 0.0
        %1072 = vmatpush1.msra.mxu0 0.0
        %1073 = vmatprep.subr.mxu0 0.0
        %1074 = vmatpush1.msra.mxu0 0.0
        %1075 = vmatprep.subr.mxu0 0.0
        %1076 = vmatpush1.msra.mxu0 0.0
        %1077 = vmatprep.subr.mxu0 0.0
        %1078 = vmatpush1.msra.mxu0 0.0
        %1079 = vmatprep.subr.mxu0 0.0
        %1080 = vmatpush1.msra.mxu0 0.0
        %1081 = vmatprep.subr.mxu0 0.0
        %1082 = vmatpush1.msra.mxu0 0.0
        %1083 = vmatprep.subr.mxu0 0.0
        %1084 = vmatpush1.msra.mxu0 0.0
        %1085 = vmatprep.subr.mxu0 0.0
        %1086 = vmatpush1.msra.mxu0 0.0
        %1087 = vmatprep.subr.mxu0 0.0
        %1088 = vmatpush1.msra.mxu0 0.0
        %1089 = vmatprep.subr.mxu0 0.0
        %1090 = vmatpush1.msra.mxu0 0.0
        %1091 = vmatprep.subr.mxu0 0.0
        %1092 = vmatpush1.msra.mxu0 0.0
        %1093 = vmatprep.subr.mxu0 0.0
        %1094 = vmatpush1.msra.mxu0 0.0
        %1095 = vmatprep.subr.mxu0 0.0
        %1096 = vmatpush1.msra.mxu0 0.0
        %1097 = vmatprep.mubr.f32.mxu0 0.0
        %1098 = vmatmul.mubr.f32.gmra.mrb[0].mxu0 %v1031
        %v1099 = vpop.f32.mrb[0].mxu0
        %v1100 = vadd.f32 0.0, %v1099
        %v1101 = vpop.f32.mrb[0].mxu0
        %1102 = vdwg.mxu0
        %1103 = vrot.lane.b32.xlu0 %v590, 104
        %v1104 = vpop.permute.xlu0 %1103
        %1105 = vrot.lane.b32.xlu0 %v590, 72
        %v1106 = vpop.permute.xlu0 %1105
        %v1107 = vsel %vm599, %v1104, 0
        %v1109 = vsel %vm599, %v1106, 0
        %1111 = vmatprep.subr.mxu0 0.0
        %1112 = vmatpush1.xpose.msra.mxu0 %v1109
        %1113 = vmatprep.subr.mxu0 0.0
        %1114 = vmatpush1.xpose.msra.mxu0 0.0
        %1115 = vmatprep.subr.mxu0 0.0
        %1116 = vmatpush1.xpose.msra.mxu0 0.0
        %1117 = vmatprep.subr.mxu0 0.0
        %1118 = vmatpush1.xpose.msra.mxu0 0.0
        %1119 = vmatprep.subr.mxu0 0.0
        %1120 = vmatpush1.xpose.msra.mxu0 0.0
        %1121 = vmatprep.subr.mxu0 0.0
        %1122 = vmatpush1.xpose.msra.mxu0 0.0
        %1123 = vmatprep.subr.mxu0 0.0
        %1124 = vmatpush1.xpose.msra.mxu0 0.0
        %1125 = vmatprep.subr.mxu0 0.0
        %1126 = vmatpush1.xpose.msra.mxu0 0.0
        %1127 = vmatprep.subr.mxu0 0.0
        %1128 = vmatpush1.xpose.msra.mxu0 0.0
        %1129 = vmatprep.subr.mxu0 0.0
        %1130 = vmatpush1.xpose.msra.mxu0 0.0
        %1131 = vmatprep.subr.mxu0 0.0
        %1132 = vmatpush1.xpose.msra.mxu0 0.0
        %1133 = vmatprep.subr.mxu0 0.0
        %1134 = vmatpush1.xpose.msra.mxu0 0.0
        %1135 = vmatprep.subr.mxu0 0.0
        %1136 = vmatpush1.xpose.msra.mxu0 0.0
        %1137 = vmatprep.subr.mxu0 0.0
        %1138 = vmatpush1.xpose.msra.mxu0 0.0
        %1139 = vmatprep.subr.mxu0 0.0
        %1140 = vmatpush1.xpose.msra.mxu0 0.0
        %1141 = vmatprep.subr.mxu0 0.0
        %1142 = vmatpush1.xpose.msra.mxu0 0.0
        %1143 = vmatprep.subr.mxu0 0.0
        %1144 = vmatpush1.xpose.msra.mxu0 0.0
        %1145 = vmatprep.subr.mxu0 0.0
        %1146 = vmatpush1.xpose.msra.mxu0 0.0
        %1147 = vmatprep.subr.mxu0 0.0
        %1148 = vmatpush1.xpose.msra.mxu0 0.0
        %1149 = vmatprep.subr.mxu0 0.0
        %1150 = vmatpush1.xpose.msra.mxu0 0.0
        %1151 = vmatprep.subr.mxu0 0.0
        %1152 = vmatpush1.xpose.msra.mxu0 0.0
        %1153 = vmatprep.subr.mxu0 0.0
        %1154 = vmatpush1.xpose.msra.mxu0 0.0
        %1155 = vmatprep.subr.mxu0 0.0
        %1156 = vmatpush1.xpose.msra.mxu0 0.0
        %1157 = vmatprep.subr.mxu0 0.0
        %1158 = vmatpush1.xpose.msra.mxu0 0.0
        %1159 = vmatprep.subr.mxu0 0.0
        %1160 = vmatpush1.xpose.msra.mxu0 0.0
        %1161 = vmatprep.subr.mxu0 0.0
        %1162 = vmatpush1.xpose.msra.mxu0 0.0
        %1163 = vmatprep.subr.mxu0 0.0
        %1164 = vmatpush1.xpose.msra.mxu0 0.0
        %1165 = vmatprep.subr.mxu0 0.0
        %1166 = vmatpush1.xpose.msra.mxu0 0.0
        %1167 = vmatprep.subr.mxu0 0.0
        %1168 = vmatpush1.xpose.msra.mxu0 0.0
        %1169 = vmatprep.subr.mxu0 0.0
        %1170 = vmatpush1.xpose.msra.mxu0 0.0
        %1171 = vmatprep.subr.mxu0 0.0
        %1172 = vmatpush1.xpose.msra.mxu0 0.0
        %1173 = vmatprep.subr.mxu0 0.0
        %1174 = vmatpush1.xpose.msra.mxu0 0.0
        %1175 = vmatprep.mubr.f32.mxu0 0.0
        %1176 = vmatmul.mubr.f32.gmra.mrb[0].mxu0 %v1107
        %v1177 = vpop.f32.mrb[0].mxu0
        %v1178 = vadd.f32 0.0, %v1177
        %v1179 = vpop.f32.mrb[0].mxu0
        %1180 = vdwg.mxu0
        %v1181 = vmul.f32 %v1178, 0.35355338
        %v1182 = vadd.f32 %v1181, %v679
        %v1183 = vsel %vm599, %v1182, -inf
        %1184 = vmax.xlane.f32.xlu0 %v1183
        %v1185 = vpop.xlane.xlu0 %1184
        %v1186 = vsub.f32 %v1182, %v1185
        %v1187 = vmul.f32 %v1186, 1.442695
        %v1188 = vpow.pop %v1187
        %v1189 = vsel %vm599, %v1188, 0.0
        %1190 = vadd.xlane.f32.xlu0 %v1189
        %v1191 = vpop.xlane.xlu0 %1190
        %v1192 = vrcp.pop %v1191
        %v1193 = vmul.f32 %v1188, %v1192
        %1194 = vrot.lane.b32.xlu0 %v590, 40
        %v1195 = vpop.permute.xlu0 %1194
        %v1198 = vsel %vm599, %v1193, 0
        %1200 = vmatprep.subr.mxu0 0.0
        %1201 = vmatpush1.msra.mxu0 %v1195
        %1202 = vmatprep.subr.mxu0 0.0
        %1203 = vmatpush1.msra.mxu0 0.0
        %1204 = vmatprep.subr.mxu0 0.0
        %1205 = vmatpush1.msra.mxu0 0.0
        %1206 = vmatprep.subr.mxu0 0.0
        %1207 = vmatpush1.msra.mxu0 0.0
        %1208 = vmatprep.subr.mxu0 0.0
        %1209 = vmatpush1.msra.mxu0 0.0
        %1210 = vmatprep.subr.mxu0 0.0
        %1211 = vmatpush1.msra.mxu0 0.0
        %1212 = vmatprep.subr.mxu0 0.0
        %1213 = vmatpush1.msra.mxu0 0.0
        %1214 = vmatprep.subr.mxu0 0.0
        %1215 = vmatpush1.msra.mxu0 0.0
        %1216 = vmatprep.subr.mxu0 0.0
        %1217 = vmatpush1.msra.mxu0 0.0
        %1218 = vmatprep.subr.mxu0 0.0
        %1219 = vmatpush1.msra.mxu0 0.0
        %1220 = vmatprep.subr.mxu0 0.0
        %1221 = vmatpush1.msra.mxu0 0.0
        %1222 = vmatprep.subr.mxu0 0.0
        %1223 = vmatpush1.msra.mxu0 0.0
        %1224 = vmatprep.subr.mxu0 0.0
        %1225 = vmatpush1.msra.mxu0 0.0
        %1226 = vmatprep.subr.mxu0 0.0
        %1227 = vmatpush1.msra.mxu0 0.0
        %1228 = vmatprep.subr.mxu0 0.0
        %1229 = vmatpush1.msra.mxu0 0.0
        %1230 = vmatprep.subr.mxu0 0.0
        %1231 = vmatpush1.msra.mxu0 0.0
        %1232 = vmatprep.subr.mxu0 0.0
        %1233 = vmatpush1.msra.mxu0 0.0
        %1234 = vmatprep.subr.mxu0 0.0
        %1235 = vmatpush1.msra.mxu0 0.0
        %1236 = vmatprep.subr.mxu0 0.0
        %1237 = vmatpush1.msra.mxu0 0.0
        %1238 = vmatprep.subr.mxu0 0.0
        %1239 = vmatpush1.msra.mxu0 0.0
        %1240 = vmatprep.subr.mxu0 0.0
        %1241 = vmatpush1.msra.mxu0 0.0
        %1242 = vmatprep.subr.mxu0 0.0
        %1243 = vmatpush1.msra.mxu0 0.0
        %1244 = vmatprep.subr.mxu0 0.0
        %1245 = vmatpush1.msra.mxu0 0.0
        %1246 = vmatprep.subr.mxu0 0.0
        %1247 = vmatpush1.msra.mxu0 0.0
        %1248 = vmatprep.subr.mxu0 0.0
        %1249 = vmatpush1.msra.mxu0 0.0
        %1250 = vmatprep.subr.mxu0 0.0
        %1251 = vmatpush1.msra.mxu0 0.0
        %1252 = vmatprep.subr.mxu0 0.0
        %1253 = vmatpush1.msra.mxu0 0.0
        %1254 = vmatprep.subr.mxu0 0.0
        %1255 = vmatpush1.msra.mxu0 0.0
        %1256 = vmatprep.subr.mxu0 0.0
        %1257 = vmatpush1.msra.mxu0 0.0
        %1258 = vmatprep.subr.mxu0 0.0
        %1259 = vmatpush1.msra.mxu0 0.0
        %1260 = vmatprep.subr.mxu0 0.0
        %1261 = vmatpush1.msra.mxu0 0.0
        %1262 = vmatprep.subr.mxu0 0.0
        %1263 = vmatpush1.msra.mxu0 0.0
        %1264 = vmatprep.mubr.f32.mxu0 0.0
        %1265 = vmatmul.mubr.f32.gmra.mrb[0].mxu0 %v1198
        %v1266 = vpop.f32.mrb[0].mxu0
        %v1267 = vadd.f32 0.0, %v1266
        %v1268 = vpop.f32.mrb[0].mxu0
        %1269 = vdwg.mxu0
        %1271 = vrot.lane.b32.xlu0 %v933, 8
        %v1272 = vpop.permute.xlu0 %1271
        %1275 = vrot.lane.b32.xlu0 %v1100, 16
        %v1276 = vpop.permute.xlu0 %1275
        %1279 = vrot.lane.b32.xlu0 %v1267, 24
        %v1280 = vpop.permute.xlu0 %1279
        %v1282 = vsel %vm599, %v766, %v1272
        %vm1283 = vcmask 130048
        %v1284 = vsel %vm1283, %v1282, %v1276
        %vm1285 = vcmask 195584
        %v1286 = vsel %vm1285, %v1284, %v1280
        %v1287 = vld [vmem:[%s6] sm:$0xff]
        %v1288 = vld [vmem:[%s6 + $0x8] sm:$0xff]
        %v1289 = vld [vmem:[%s6 + $0x10] sm:$0xff]
        %v1290 = vld [vmem:[%s6 + $0x18] sm:$0xff]
        %v1291 = vld [vmem:[%s7] sm:$0x1]
        %v1293 = vlaneseq
        %v1294 = vshrl.u32 %v1293, 7
        %v1295 = vsub.s32 0, %v1294
        %v1296 = vrot.slane %v1291, %v1295
        %v1299 = vsel %vm480, %v1286, 0
        %1301 = vmatprep.subr.mxu0 0.0
        %1302 = vmatpush1.msra.mxu0 %v1287
        %1303 = vmatprep.subr.mxu0 0.0
        %1304 = vmatpush1.msra.mxu0 %v1288
        %1305 = vmatprep.subr.mxu0 0.0
        %1306 = vmatpush1.msra.mxu0 %v1289
        %1307 = vmatprep.subr.mxu0 0.0
        %1308 = vmatpush1.msra.mxu0 %v1290
        %1309 = vmatprep.subr.mxu0 0.0
        %1310 = vmatpush1.msra.mxu0 0.0
        %1311 = vmatprep.subr.mxu0 0.0
        %1312 = vmatpush1.msra.mxu0 0.0
        %1313 = vmatprep.subr.mxu0 0.0
        %1314 = vmatpush1.msra.mxu0 0.0
        %1315 = vmatprep.subr.mxu0 0.0
        %1316 = vmatpush1.msra.mxu0 0.0
        %1317 = vmatprep.subr.mxu0 0.0
        %1318 = vmatpush1.msra.mxu0 0.0
        %1319 = vmatprep.subr.mxu0 0.0
        %1320 = vmatpush1.msra.mxu0 0.0
        %1321 = vmatprep.subr.mxu0 0.0
        %1322 = vmatpush1.msra.mxu0 0.0
        %1323 = vmatprep.subr.mxu0 0.0
        %1324 = vmatpush1.msra.mxu0 0.0
        %1325 = vmatprep.subr.mxu0 0.0
        %1326 = vmatpush1.msra.mxu0 0.0
        %1327 = vmatprep.subr.mxu0 0.0
        %1328 = vmatpush1.msra.mxu0 0.0
        %1329 = vmatprep.subr.mxu0 0.0
        %1330 = vmatpush1.msra.mxu0 0.0
        %1331 = vmatprep.subr.mxu0 0.0
        %1332 = vmatpush1.msra.mxu0 0.0
        %1333 = vmatprep.subr.mxu0 0.0
        %1334 = vmatpush1.msra.mxu0 0.0
        %1335 = vmatprep.subr.mxu0 0.0
        %1336 = vmatpush1.msra.mxu0 0.0
        %1337 = vmatprep.subr.mxu0 0.0
        %1338 = vmatpush1.msra.mxu0 0.0
        %1339 = vmatprep.subr.mxu0 0.0
        %1340 = vmatpush1.msra.mxu0 0.0
        %1341 = vmatprep.subr.mxu0 0.0
        %1342 = vmatpush1.msra.mxu0 0.0
        %1343 = vmatprep.subr.mxu0 0.0
        %1344 = vmatpush1.msra.mxu0 0.0
        %1345 = vmatprep.subr.mxu0 0.0
        %1346 = vmatpush1.msra.mxu0 0.0
        %1347 = vmatprep.subr.mxu0 0.0
        %1348 = vmatpush1.msra.mxu0 0.0
        %1349 = vmatprep.subr.mxu0 0.0
        %1350 = vmatpush1.msra.mxu0 0.0
        %1351 = vmatprep.subr.mxu0 0.0
        %1352 = vmatpush1.msra.mxu0 0.0
        %1353 = vmatprep.subr.mxu0 0.0
        %1354 = vmatpush1.msra.mxu0 0.0
        %1355 = vmatprep.subr.mxu0 0.0
        %1356 = vmatpush1.msra.mxu0 0.0
        %1357 = vmatprep.subr.mxu0 0.0
        %1358 = vmatpush1.msra.mxu0 0.0
        %1359 = vmatprep.subr.mxu0 0.0
        %1360 = vmatpush1.msra.mxu0 0.0
        %1361 = vmatprep.subr.mxu0 0.0
        %1362 = vmatpush1.msra.mxu0 0.0
        %1363 = vmatprep.subr.mxu0 0.0
        %1364 = vmatpush1.msra.mxu0 0.0
        %1365 = vmatprep.mubr.f32.mxu0 0.0
        %1366 = vmatmul.mubr.f32.gmra.mrb[0].mxu0 %v1299
        %v1367 = vpop.f32.mrb[0].mxu0
        %v1368 = vadd.f32 %v1296, %v1367
        %v1369 = vpop.f32.mrb[0].mxu0
        %1370 = vdwg.mxu0
        %v1371 = vadd.f32 %v477, %v1368
        %v1372 = vld [vmem:[%s8] sm:$0x1]
        %v1373 = vld [vmem:[%s9] sm:$0x1]
        %v1374 = vsel %vm480, %v1371, 0.0
        %1375 = vadd.xlane.f32.xlu0 %v1374
        %v1376 = vpop.xlane.xlu0 %1375
        %v1377 = vmul.f32 %v1376, %v484
        %v1378 = vsub.f32 %v1371, %v1377
        %v1379 = vmul.f32 %v1378, %v1378
        %v1380 = vsel %vm480, %v1379, 0.0
        %1381 = vadd.xlane.f32.xlu0 %v1380
        %v1382 = vpop.xlane.xlu0 %1381
        %v1383 = vmul.f32 %v1382, %v484
        %v1384 = vadd.f32 %v1383, 1e-05
        %v1385 = vrsqrt.pop %v1384
        %v1386 = vmul.f32 %v1378, %v1385
        %v1388 = vlaneseq
        %v1389 = vshrl.u32 %v1388, 7
        %v1390 = vsub.s32 0, %v1389
        %v1391 = vrot.slane %v1372, %v1390
        %v1393 = vmul.f32 %v1386, %v1391
        %v1395 = vlaneseq
        %v1396 = vshrl.u32 %v1395, 7
        %v1397 = vsub.s32 0, %v1396
        %v1398 = vrot.slane %v1373, %v1397
        %v1400 = vadd.f32 %v1393, %v1398
        %v1401 = vld [vmem:[%s10] sm:$0xff]
        %v1402 = vld [vmem:[%s10 + $0x8] sm:$0xff]
        %v1403 = vld [vmem:[%s10 + $0x10] sm:$0xff]
        %v1404 = vld [vmem:[%s10 + $0x18] sm:$0xff]
        %v1405 = vld [vmem:[%s11] sm:$0x1]
        %v1407 = vlaneseq
        %v1408 = vshrl.u32 %v1407, 7
        %v1409 = vsub.s32 0, %v1408
        %v1410 = vrot.slane %v1405, %v1409
        %v1413 = vsel %vm480, %v1400, 0
        %1415 = vmatprep.subr.mxu0 0.0
        %1416 = vmatpush1.msra.mxu0 %v1401
        %1417 = vmatprep.subr.mxu0 0.0
        %1418 = vmatpush1.msra.mxu0 %v1402
        %1419 = vmatprep.subr.mxu0 0.0
        %1420 = vmatpush1.msra.mxu0 %v1403
        %1421 = vmatprep.subr.mxu0 0.0
        %1422 = vmatpush1.msra.mxu0 %v1404
        %1423 = vmatprep.subr.mxu0 0.0
        %1424 = vmatpush1.msra.mxu0 0.0
        %1425 = vmatprep.subr.mxu0 0.0
        %1426 = vmatpush1.msra.mxu0 0.0
        %1427 = vmatprep.subr.mxu0 0.0
        %1428 = vmatpush1.msra.mxu0 0.0
        %1429 = vmatprep.subr.mxu0 0.0
        %1430 = vmatpush1.msra.mxu0 0.0
        %1431 = vmatprep.subr.mxu0 0.0
        %1432 = vmatpush1.msra.mxu0 0.0
        %1433 = vmatprep.subr.mxu0 0.0
        %1434 = vmatpush1.msra.mxu0 0.0
        %1435 = vmatprep.subr.mxu0 0.0
        %1436 = vmatpush1.msra.mxu0 0.0
        %1437 = vmatprep.subr.mxu0 0.0
        %1438 = vmatpush1.msra.mxu0 0.0
        %1439 = vmatprep.subr.mxu0 0.0
        %1440 = vmatpush1.msra.mxu0 0.0
        %1441 = vmatprep.subr.mxu0 0.0
        %1442 = vmatpush1.msra.mxu0 0.0
        %1443 = vmatprep.subr.mxu0 0.0
        %1444 = vmatpush1.msra.mxu0 0.0
        %1445 = vmatprep.subr.mxu0 0.0
        %1446 = vmatpush1.msra.mxu0 0.0
        %1447 = vmatprep.subr.mxu0 0.0
        %1448 = vmatpush1.msra.mxu0 0.0
        %1449 = vmatprep.subr.mxu0 0.0
        %1450 = vmatpush1.msra.mxu0 0.0
        %1451 = vmatprep.subr.mxu0 0.0
        %1452 = vmatpush1.msra.mxu0 0.0
        %1453 = vmatprep.subr.mxu0 0.0
        %1454 = vmatpush1.msra.mxu0 0.0
        %1455 = vmatprep.subr.mxu0 0.0
        %1456 = vmatpush1.msra.mxu0 0.0
        %1457 = vmatprep.subr.mxu0 0.0
        %1458 = vmatpush1.msra.mxu0 0.0
        %1459 = vmatprep.subr.mxu0 0.0
        %1460 = vmatpush1.msra.mxu0 0.0
        %1461 = vmatprep.subr.mxu0 0.0
        %1462 = vmatpush1.msra.mxu0 0.0
        %1463 = vmatprep.subr.mxu0 0.0
        %1464 = vmatpush1.msra.mxu0 0.0
        %1465 = vmatprep.subr.mxu0 0.0
        %1466 = vmatpush1.msra.mxu0 0.0
        %1467 = vmatprep.subr.mxu0 0.0
        %1468 = vmatpush1.msra.mxu0 0.0
        %1469 = vmatprep.subr.mxu0 0.0
        %1470 = vmatpush1.msra.mxu0 0.0
        %1471 = vmatprep.subr.mxu0 0.0
        %1472 = vmatpush1.msra.mxu0 0.0
        %1473 = vmatprep.subr.mxu0 0.0
        %1474 = vmatpush1.msra.mxu0 0.0
        %1475 = vmatprep.subr.mxu0 0.0
        %1476 = vmatpush1.msra.mxu0 0.0
        %1477 = vmatprep.subr.mxu0 0.0
        %1478 = vmatpush1.msra.mxu0 0.0
        %1479 = vmatprep.mubr.f32.mxu0 0.0
        %1480 = vmatmul.mubr.f32.gmra.mrb[0].mxu0 %v1413
        %v1481 = vpop.f32.mrb[0].mxu0
        %v1482 = vadd.f32 %v1410, %v1481
        %v1483 = vpop.f32.mrb[0].mxu0
        %1484 = vdwg.mxu0
        %v1485 = vmul.f32 %v1482, 1.702
        %v1486 = vxor.u32 %v1485, 2147483648
        %v1487 = vmul.f32 %v1486, 1.442695
        %v1488 = vpow.pop %v1487
        %v1489 = vadd.f32 %v1488, 1.0
        %v1490 = vrcp.pop %v1489
        %v1491 = vmul.f32 1.0, %v1490
        %v1492 = vmul.f32 %v1482, %v1491
        %v1493 = vld [vmem:[%s12] sm:$0xff]
        %v1494 = vld [vmem:[%s12 + $0x8] sm:$0xff]
        %v1495 = vld [vmem:[%s12 + $0x10] sm:$0xff]
        %v1496 = vld [vmem:[%s12 + $0x18] sm:$0xff]
        %v1497 = vld [vmem:[%s12 + $0x20] sm:$0xff]
        %v1498 = vld [vmem:[%s12 + $0x28] sm:$0xff]
        %v1499 = vld [vmem:[%s12 + $0x30] sm:$0xff]
        %v1500 = vld [vmem:[%s12 + $0x38] sm:$0xff]
        %v1501 = vld [vmem:[%s12 + $0x40] sm:$0xff]
        %v1502 = vld [vmem:[%s12 + $0x48] sm:$0xff]
        %v1503 = vld [vmem:[%s12 + $0x50] sm:$0xff]
        %v1504 = vld [vmem:[%s12 + $0x58] sm:$0xff]
        %v1505 = vld [vmem:[%s12 + $0x60] sm:$0xff]
        %v1506 = vld [vmem:[%s12 + $0x68] sm:$0xff]
        %v1507 = vld [vmem:[%s12 + $0x70] sm:$0xff]
        %v1508 = vld [vmem:[%s12 + $0x78] sm:$0xff]
        %v1509 = vld [vmem:[%s13] sm:$0x1]
        %v1511 = vlaneseq
        %v1512 = vshrl.u32 %v1511, 7
        %v1513 = vsub.s32 0, %v1512
        %v1514 = vrot.slane %v1509, %v1513
        %1516 = vmatprep.subr.mxu0 0.0
        %1517 = vmatpush1.msra.mxu0 %v1493
        %1518 = vmatprep.subr.mxu0 0.0
        %1519 = vmatpush1.msra.mxu0 %v1494
        %1520 = vmatprep.subr.mxu0 0.0
        %1521 = vmatpush1.msra.mxu0 %v1495
        %1522 = vmatprep.subr.mxu0 0.0
        %1523 = vmatpush1.msra.mxu0 %v1496
        %1524 = vmatprep.subr.mxu0 0.0
        %1525 = vmatpush1.msra.mxu0 %v1497
        %1526 = vmatprep.subr.mxu0 0.0
        %1527 = vmatpush1.msra.mxu0 %v1498
        %1528 = vmatprep.subr.mxu0 0.0
        %1529 = vmatpush1.msra.mxu0 %v1499
        %1530 = vmatprep.subr.mxu0 0.0
        %1531 = vmatpush1.msra.mxu0 %v1500
        %1532 = vmatprep.subr.mxu0 0.0
        %1533 = vmatpush1.msra.mxu0 %v1501
        %1534 = vmatprep.subr.mxu0 0.0
        %1535 = vmatpush1.msra.mxu0 %v1502
        %1536 = vmatprep.subr.mxu0 0.0
        %1537 = vmatpush1.msra.mxu0 %v1503
        %1538 = vmatprep.subr.mxu0 0.0
        %1539 = vmatpush1.msra.mxu0 %v1504
        %1540 = vmatprep.subr.mxu0 0.0
        %1541 = vmatpush1.msra.mxu0 %v1505
        %1542 = vmatprep.subr.mxu0 0.0
        %1543 = vmatpush1.msra.mxu0 %v1506
        %1544 = vmatprep.subr.mxu0 0.0
        %1545 = vmatpush1.msra.mxu0 %v1507
        %1546 = vmatprep.subr.mxu0 0.0
        %1547 = vmatpush1.msra.mxu0 %v1508
        %1548 = vmatprep.subr.mxu0 0.0
        %1549 = vmatpush1.msra.mxu0 0.0
        %1550 = vmatprep.subr.mxu0 0.0
        %1551 = vmatpush1.msra.mxu0 0.0
        %1552 = vmatprep.subr.mxu0 0.0
        %1553 = vmatpush1.msra.mxu0 0.0
        %1554 = vmatprep.subr.mxu0 0.0
        %1555 = vmatpush1.msra.mxu0 0.0
        %1556 = vmatprep.subr.mxu0 0.0
        %1557 = vmatpush1.msra.mxu0 0.0
        %1558 = vmatprep.subr.mxu0 0.0
        %1559 = vmatpush1.msra.mxu0 0.0
        %1560 = vmatprep.subr.mxu0 0.0
        %1561 = vmatpush1.msra.mxu0 0.0
        %1562 = vmatprep.subr.mxu0 0.0
        %1563 = vmatpush1.msra.mxu0 0.0
        %1564 = vmatprep.subr.mxu0 0.0
        %1565 = vmatpush1.msra.mxu0 0.0
        %1566 = vmatprep.subr.mxu0 0.0
        %1567 = vmatpush1.msra.mxu0 0.0
        %1568 = vmatprep.subr.mxu0 0.0
        %1569 = vmatpush1.msra.mxu0 0.0
        %1570 = vmatprep.subr.mxu0 0.0
        %1571 = vmatpush1.msra.mxu0 0.0
        %1572 = vmatprep.subr.mxu0 0.0
        %1573 = vmatpush1.msra.mxu0 0.0
        %1574 = vmatprep.subr.mxu0 0.0
        %1575 = vmatpush1.msra.mxu0 0.0
        %1576 = vmatprep.subr.mxu0 0.0
        %1577 = vmatpush1.msra.mxu0 0.0
        %1578 = vmatprep.subr.mxu0 0.0
        %1579 = vmatpush1.msra.mxu0 0.0
        %1580 = vmatprep.mubr.f32.mxu0 0.0
        %1581 = vmatmul.mubr.f32.gmra.mrb[0].mxu0 %v1492
        %v1582 = vpop.f32.mrb[0].mxu0
        %v1583 = vadd.f32 %v1514, %v1582
        %v1584 = vpop.f32.mrb[0].mxu0
        %1585 = vdwg.mxu0
        %v1586 = vadd.f32 %v1371, %v1583
        %1587 = vst.msk [vmem:[%s469] sm:$0xff] %vm480, %v1586
        %s1588 = sand.u32 %s340, 1
        %s1589 = scalar_lea.sflag [#allocation3], %s1588
        %s1590 = sand.u32 %s340, 1
        %s1591 = smul.addr %s1590, 8
        %s1592 = scalar_lea.vmem [#allocation2], %s1591
        // Predicated region
        $region77: #{tpu_custom_call.1} parent=75 // pred_check
          %p1593 = pneg %p350
        $region78: #{tpu_custom_call.1} parent=75 // pred_check_branch
          %1595 = sbr.rel (%p1593) target = $region80
        $region79: #{tpu_custom_call.1} parent=75 // pred_region
          %s1597 = ssub.s32 128, 128
          %1598 = vsyncadd %s1589, %s1597
          %s1599 = smul.addr %s28, 128
          %s1600 = scalar_lea.hbm %s14, %s1599
          %s1602 = sshll.u32 %s1592, 4
          %s1603 = int_to_ptr.vmem [resolvable:$true] %s1602
          %1605 = dma.vmem_to_hbm [thread:$0]  %s1603, 128, %s1600, %s1589
        $region80: #{tpu_custom_call.1} parent=75 // pred_fallthru
          _
      $region76: #{tpu_custom_call.1} parent=5 // pred_fallthru
        _
      %p1606 = scmp.le.s32.totalorder 2, %s23
      // Predicated region
      $region81: #{tpu_custom_call.1} parent=5 // pred_check
        %p1607 = pneg %p1606
      $region82: #{tpu_custom_call.1} parent=5 // pred_check_branch
        %1609 = sbr.rel (%p1607) target = $region84
      $region83: #{tpu_custom_call.1} parent=5 // pred_region
        %s1610 = ssub.s32 %s23, 2
        // Predicated region
        $region85: #{tpu_custom_call.1} parent=83 // pred_check
          %p1611 = pneg %p356
        $region86: #{tpu_custom_call.1} parent=83 // pred_check_branch
          %1613 = sbr.rel (%p1611) target = $region88
        $region87: #{tpu_custom_call.1} parent=83 // pred_region
          %s1614 = sand.u32 %s341, 1
          %s1615 = scalar_lea.sflag [#allocation3], %s1614
          %s1616 = sand.u32 %s341, 1
          %s1617 = smul.addr %s1616, 8
          %s1618 = scalar_lea.vmem [#allocation2], %s1617
          %1619 = dma.done %s1615, 128
        $region88: #{tpu_custom_call.1} parent=83 // pred_fallthru
          _
      $region84: #{tpu_custom_call.1} parent=5 // pred_fallthru
        _
    $region6: #{tpu_custom_call.1} parent=1 // loop_footer
      %s27 = sadd.s32 1, %s23
    $region7: #{tpu_custom_call.1} parent=1 // loop_footer_branch
      %22 = sbr.rel target = $region3
    $region8: #{tpu_custom_call.1} parent=1 // loop_exit
      _
    %1620 = vsyncpa [#allocation3], 1
    %s1621 = scalar_lea.sflag [#allocation3], 1
    %1622 = vsyncpa %s1621, 1

</llo_original>
